<compile_context>
chip_gen: v6e
topology: v6e:2x2x1
jax: 0.10.0
libtpu: 0.0.40
codegen_flags: <defaults>
</compile_context>

<pallas_src>
import functools

import jax
import jax.numpy as jnp
from jax.experimental import pallas as pl
from jax.experimental.pallas import tpu as pltpu


_INV_SQRT2 = 0.7071067811865476


def _sanitize(x, bound):
    """nan -> 0, +inf -> +bound, -inf -> -bound; identity on finite values."""
    x = jnp.where(x != x, jnp.zeros_like(x), x)                      # NaN -> 0
    return jnp.where(jnp.isinf(x), jnp.where(x > 0, bound, -bound), x)


def _erf_approx(x):
    """erf via Abramowitz & Stegun 7.1.26 (|abs err| <= 1.5e-7).

    Uses only mul/add/div/abs/where/exp so it lowers on every TPU generation,
    and routes the transcendental to the EUP slot (exp) instead of a long VALU
    polynomial.
    """
    p = 0.3275911
    a1, a2, a3, a4, a5 = (0.254829592, -0.284496736, 1.421413741,
                          -1.453152027, 1.061405429)
    ax = jnp.abs(x)
    t = 1.0 / (1.0 + p * ax)
    poly = ((((a5 * t + a4) * t + a3) * t + a2) * t + a1) * t
    y = 1.0 - poly * jnp.exp(-(ax * ax))
    return jnp.where(x < 0, -y, y)


def _ffn_kernel(x_ref, gamma_ref, beta_ref, w1t_ref, b1_ref, w2_ref, b2_ref,
                out_ref, xn_ref, acc_ref, *, tf, resident, elem_dtype):
    k = pl.program_id(1)

    # ---- per-row-tile prologue: LayerNorm + sanitize, accumulator init ----
    @pl.when(k == 0)
    def _():
        x = x_ref[...].astype(jnp.float32)                           # (TN, D)
        mean = jnp.mean(x, axis=-1, keepdims=True)
        xc = x - mean
        var = jnp.mean(xc * xc, axis=-1, keepdims=True)
        xnorm = xc * jax.lax.rsqrt(var + 1e-5) * gamma_ref[...] + beta_ref[...]
        xnorm = _sanitize(xnorm, 1.0)
        xn_ref[...] = xnorm.astype(jnp.bfloat16)        # cached MXU operand
        acc_ref[...] = jnp.zeros_like(acc_ref)

    # ---- select the k-th hidden chunk of the weights ----
    if resident:
        # Full weights live in VMEM; slice rows (sublane dim) of (F, D).
        off = pl.multiple_of(k * tf, 128)
        w1t_blk = w1t_ref[pl.ds(off, tf), :]                         # (TF, D)
        w2_blk = w2_ref[pl.ds(off, tf), :]                           # (TF, D)
    else:
        w1t_blk = w1t_ref[...]                                       # (TF, D)
        w2_blk = w2_ref[...]                                         # (TF, D)

    # ---- h_k = gelu(sanitize(x_norm @ w1[:, k_chunk] + b1_chunk)) ----
    # First matmul is an NT contraction (contract on D), MXU-native.
    h = jax.lax.dot_general(xn_ref[...], w1t_blk,
                            (((1,), (1,)), ((), ())),
                            preferred_element_type=jnp.float32)      # (TN, TF)
    h = _sanitize(h + b1_ref[...], 5.0)
    h = h.astype(elem_dtype)
    h = 0.5 * h * (1.0 + _erf_approx(h * _INV_SQRT2))    # exact erf-GELU
    # dropout1: identity in eval mode.

    acc_ref[...] += jnp.dot(h.astype(jnp.bfloat16), w2_blk,
                            preferred_element_type=jnp.float32)      # (TN, D)

    # ---- epilogue: bias + sanitize + residual + sanitize + store ----
    @pl.when(k == pl.num_programs(1) - 1)
    def _():
        y = _sanitize(acc_ref[...] + b2_ref[...], 5.0)
        # dropout2: identity in eval mode.
        out = _sanitize(x_ref[...].astype(jnp.float32) + y, 5.0)
        out_ref[...] = out.astype(out_ref.dtype)


def _round_up(a, b):
    return (a + b - 1) // b * b


def _cdiv(a, b):
    return (a + b - 1) // b


def _tpu_kind():
    try:
        return jax.devices()[0].device_kind.lower()
    except Exception:
        return ""


def _vmem_estimate(tn, tf, d, f, x_itemsize, resident):
    """Approx live VMEM: 2x-buffered blocks + scratch + hidden-chunk temps."""
    wf = f if resident else tf
    est = 2 * tn * d * x_itemsize * 2            # x + out blocks (double-buffered)
    est += tn * d * (2 + 4)                      # xn (bf16) + acc (f32) scratch
    est += 2 * 4 * (3 * d + tf)                  # gamma/beta/b2 + b1 blocks
    est += 2 * 2 * (2 * wf * d)                  # w1t + w2 blocks (bf16, x2 buf)
    est += tn * tf * 16                          # (TN, TF) hidden temporaries
    return est


def _pick_tiles(n, d, f, x_itemsize, is_v7, budget, allow_resident, max_tf):
    tf_cands = [t for t in (2048, 1024, 512, 256, 128)
                if f % t == 0 and (max_tf is None or t <= max_tf)]
    if not tf_cands:
        tf_cands = [128]

    def v7_adjust(tn):
        # v7x has 2 TensorCores per chip: keep >= 2 row tiles on the "parallel"
        # axis so the second core is not idle for small/medium N.
        if is_v7 and n > 8 and _cdiv(n, tn) < 2:
            tn = _round_up(_cdiv(n, 2), 8)
        return tn

    # Preferred: full weight residency (w1/w2 DMAed once, not per row tile).
    if allow_resident:
        tn = v7_adjust(min(256, _round_up(n, 8)))
        for tf in tf_cands:
            if _vmem_estimate(tn, tf, d, f, x_itemsize, True) <= budget:
                return tn, tf, True

    # Fallback: stream weight chunks; take the largest row tile that fits the
    # budget so the weight re-streaming is amortized over more rows.
    for tn_cand in (1024, 512, 256, 128, 64, 32, 16, 8):
        tn = v7_adjust(min(tn_cand, _round_up(n, 8)))
        for tf in tf_cands:
            if _vmem_estimate(tn, tf, d, f, x_itemsize, False) <= budget:
                return tn, tf, False
    return v7_adjust(8), tf_cands[-1], False


def feedforward(x, gamma, beta, w1, b1, w2, b2, *, force_stream=False,
                max_tf=None):
    """x: (batch, seq, embed). Weights stored transposed vs PyTorch:
    w1: (D, F), w2: (F, D). Returns the same shape/dtype as x."""
    B, S, D = x.shape
    F_dim = w1.shape[1]
    assert D % 128 == 0, "embed_dim must be a multiple of 128 (lane-dense)"
    assert F_dim % 128 == 0, "ff_dim must be a multiple of 128"

    kind = _tpu_kind()
    is_v7 = "7" in kind
    is_pre_v6 = any(t in kind for t in ("v2", "v3", "v4", "v5"))
    # v5e/v6e: 128 MiB physical VMEM -> allow ~100 MiB scoped;
    # v7x (and unknown chips): 64 MiB per TensorCore -> cap at 48 MiB.
    vmem_cap = (100 << 20) if (is_pre_v6 or "v6" in kind) else (48 << 20)
    # bf16 elementwise chain where the VPU has packed bf16 (v6e / v7x);
    # f32 on v5-class chips (no bf16 VALU).
    elem_dtype = jnp.float32 if is_pre_v6 else jnp.bfloat16

    N = B * S
    x_itemsize = jnp.dtype(x.dtype).itemsize
    budget = int(0.75 * vmem_cap)
    TN, TF, resident = _pick_tiles(N, D, F_dim, x_itemsize, is_v7, budget,
                                   not force_stream, max_tf)
    N_pad = _round_up(N, TN)

    x2 = x.reshape(N, D)
    if N_pad != N:
        x2 = jnp.pad(x2, ((0, N_pad - N), (0, 0)))

    # bf16 MXU operands (f32 accumulation inside the kernel).  w1 is held
    # transposed (F, D) so the k-chunk slice is always a sublane slice.
    w1t_bf = w1.T.astype(jnp.bfloat16)        # (F, D)
    w2_bf = w2.astype(jnp.bfloat16)           # (F, D)

    grid = (N_pad // TN, F_dim // TF)
    n_row_tiles = grid[0]

    if resident:
        w1_spec = pl.BlockSpec((F_dim, D), lambda i, k: (0, 0))
        w2_spec = pl.BlockSpec((F_dim, D), lambda i, k: (0, 0))
    else:
        w1_spec = pl.BlockSpec((TF, D), lambda i, k: (k, 0))
        w2_spec = pl.BlockSpec((TF, D), lambda i, k: (k, 0))
    b1_spec = pl.BlockSpec((1, TF), lambda i, k: (0, k))

    # Cost estimate: include the per-row-tile weight re-streaming when the
    # weights are not VMEM-resident.
    weight_bytes = 2 * 2 * D * F_dim                 # w1 + w2, bf16
    if not resident:
        weight_bytes *= n_row_tiles
    bytes_accessed = 2 * N_pad * D * x_itemsize + weight_bytes \
        + 4 * (F_dim + 3 * D)
    flops = 4 * N_pad * D * F_dim + 40 * N_pad * F_dim + 30 * N_pad * D
    transcendentals = N_pad * F_dim                  # one exp per hidden element

    est = _vmem_estimate(TN, TF, D, F_dim, x_itemsize, resident)
    vmem_limit = int(min(max(int(est * 1.25), 32 << 20), vmem_cap))

    kernel = functools.partial(_ffn_kernel, tf=TF, resident=resident,
                               elem_dtype=elem_dtype)

    out = pl.pallas_call(
        kernel,
        out_shape=jax.ShapeDtypeStruct((N_pad, D), x.dtype),
        grid_spec=pltpu.PrefetchScalarGridSpec(
            num_scalar_prefetch=0,
            grid=grid,
            in_specs=[
                pl.BlockSpec((TN, D), lambda i, k: (i, 0)),   # x (resident over k)
                pl.BlockSpec((1, D), lambda i, k: (0, 0)),    # gamma
                pl.BlockSpec((1, D), lambda i, k: (0, 0)),    # beta
                w1_spec,                                      # w1^T (bf16)
                b1_spec,                                      # b1 chunk
                w2_spec,                                      # w2 (bf16)
                pl.BlockSpec((1, D), lambda i, k: (0, 0)),    # b2
            ],
            out_specs=pl.BlockSpec((TN, D), lambda i, k: (i, 0)),
            scratch_shapes=[pltpu.VMEM((TN, D), jnp.bfloat16),   # LayerNorm cache
                            pltpu.VMEM((TN, D), jnp.float32)],   # Linear2 accum
        ),
        compiler_params=pltpu.CompilerParams(
            dimension_semantics=("parallel", "arbitrary"),
            vmem_limit_bytes=vmem_limit),
        cost_estimate=pl.CostEstimate(flops=int(flops),
                                      transcendentals=int(transcendentals),
                                      bytes_accessed=int(bytes_accessed)),
    )(x2, gamma.reshape(1, D), beta.reshape(1, D),
      w1t_bf, b1.reshape(1, F_dim), w2_bf, b2.reshape(1, D))

    return out[:N].reshape(B, S, D)


def init_params(key, embed_dim, ff_dim):
    """Mimics nn.Linear (uniform +-1/sqrt(fan_in)) and nn.LayerNorm (gamma=1,
    beta=0). Weights stored transposed vs PyTorch: (in_features, out_features)."""
    k1, k2, k3, k4 = jax.random.split(key, 4)
    bound1 = 1.0 / jnp.sqrt(embed_dim)
    bound2 = 1.0 / jnp.sqrt(ff_dim)
    w1 = jax.random.uniform(k1, (embed_dim, ff_dim), jnp.float32, -bound1, bound1)
    b1 = jax.random.uniform(k2, (ff_dim,), jnp.float32, -bound1, bound1)
    w2 = jax.random.uniform(k3, (ff_dim, embed_dim), jnp.float32, -bound2, bound2)
    b2 = jax.random.uniform(k4, (embed_dim,), jnp.float32, -bound2, bound2)
    gamma = jnp.ones((embed_dim,), jnp.float32)
    beta = jnp.zeros((embed_dim,), jnp.float32)
    return gamma, beta, w1, b1, w2, b2


def feedforward_ref(x, gamma, beta, w1, b1, w2, b2):
    """Pure-JAX f32 reference, including the nan/inf sanitization paths."""
    x = x.astype(jnp.float32)
    mean = jnp.mean(x, axis=-1, keepdims=True)
    var = jnp.mean((x - mean) ** 2, axis=-1, keepdims=True)
    xn = (x - mean) * jax.lax.rsqrt(var + 1e-5) * gamma + beta
    xn = _sanitize(xn, 1.0)
    h = xn @ w1 + b1
    h = _sanitize(h, 5.0)
    h = 0.5 * h * (1.0 + jax.lax.erf(h * _INV_SQRT2))
    y = h @ w2 + b2
    y = _sanitize(y, 5.0)
    return _sanitize(x + y, 5.0)


if __name__ == "__main__":
    # Small shapes consistent with the module (ff_dim default 1024);
    # embed_dim chosen lane-dense (multiple of 128).
    batch, seq, embed_dim, ff_dim = 2, 8, 128, 1024

    key = jax.random.PRNGKey(0)
    kx, kp = jax.random.split(key)
    x = jax.random.normal(kx, (batch, seq, embed_dim), jnp.float32)
    params = init_params(kp, embed_dim, ff_dim)
    ref = feedforward_ref(x, *params)

    def check(out, ref_out, tag):
        err = float(jnp.max(jnp.abs(out - ref_out)))
        # bf16 MXU operands / bf16 elementwise chain with f32 accumulation ->
        # loose tolerance vs the f32 reference.
        assert jnp.allclose(out, ref_out, atol=6e-2, rtol=6e-2), \
            f"{tag}: mismatch vs reference (max abs err {err})"

    # 1) default path (weights fully VMEM-resident at these shapes)
    out = jax.block_until_ready(feedforward(x, *params))
    assert out.shape == x.shape and out.dtype == x.dtype
    check(out, ref, "resident")

    # 2) resident path with several hidden-dim chunks (exercises pl.ds slicing)
    out_c = jax.block_until_ready(feedforward(x, *params, max_tf=256))
    check(out_c, ref, "resident-chunked")

    # 3) streamed-weight fallback path (exercises the non-resident BlockSpecs)
    out_s = jax.block_until_ready(
        feedforward(x, *params, force_stream=True, max_tf=256))
    check(out_s, ref, "streamed")

    # 4) nan/inf sanitization path (covers the _sanitize semantics)
    x_bad = x.at[0, 0, 0].set(jnp.nan).at[1, 3, 5].set(jnp.inf) \
             .at[0, 7, 64].set(-jnp.inf)
    ref_bad = feedforward_ref(x_bad, *params)
    out_bad = jax.block_until_ready(feedforward(x_bad, *params))
    assert bool(jnp.all(jnp.isfinite(out_bad)))
    check(out_bad, ref_bad, "sanitize")

    print("KERNEL_OK")
</pallas_src>

<mosaic_0001>
module attributes {stable_mosaic.version = 11 : i64} {
  func.func @_ffn_kernel(%arg0: i32, %arg1: i32, %arg2: memref<16x128xf32, #tpu.memory_space<vmem>>, %arg3: memref<1x128xf32, #tpu.memory_space<vmem>>, %arg4: memref<1x128xf32, #tpu.memory_space<vmem>>, %arg5: memref<1024x128xbf16, #tpu.memory_space<vmem>>, %arg6: memref<1x1024xf32, #tpu.memory_space<vmem>>, %arg7: memref<1024x128xbf16, #tpu.memory_space<vmem>>, %arg8: memref<1x128xf32, #tpu.memory_space<vmem>>, %arg9: memref<16x128xf32, #tpu.memory_space<vmem>>, %arg10: memref<16x128xbf16, #tpu.memory_space<vmem>>, %arg11: memref<16x128xf32, #tpu.memory_space<vmem>>) attributes {dimension_semantics = [#tpu.dimension_semantics<parallel>, #tpu.dimension_semantics<arbitrary>], iteration_bounds = array<i64: 1, 1>, scalar_prefetch = 0 : i64, scratch_operands = 2 : i64, tpu.core_type = #tpu.core_type<tc>, window_params = [{transform_indices = @transform_0, window_bounds = array<i64: 16, 128>}, {pipeline_mode = #tpu.pipeline_mode<synchronous>, transform_indices = @transform_1, window_bounds = array<i64: 1, 128>}, {pipeline_mode = #tpu.pipeline_mode<synchronous>, transform_indices = @transform_2, window_bounds = array<i64: 1, 128>}, {pipeline_mode = #tpu.pipeline_mode<synchronous>, transform_indices = @transform_3, window_bounds = array<i64: 1024, 128>}, {transform_indices = @transform_4, window_bounds = array<i64: 1, 1024>}, {pipeline_mode = #tpu.pipeline_mode<synchronous>, transform_indices = @transform_5, window_bounds = array<i64: 1024, 128>}, {pipeline_mode = #tpu.pipeline_mode<synchronous>, transform_indices = @transform_6, window_bounds = array<i64: 1, 128>}, {transform_indices = @transform_7, window_bounds = array<i64: 16, 128>}]} {
    %c0_i32 = arith.constant 0 : i32
    %0 = arith.cmpi eq, %arg1, %c0_i32 : i32
    %1 = arith.extui %0 : i1 to i32
    %c0_i32_0 = arith.constant 0 : i32
    %2 = arith.cmpi ne, %1, %c0_i32_0 : i32
    scf.if %2 {
      %c0_33 = arith.constant 0 : index
      %c0_34 = arith.constant 0 : index
      %74 = vector.load %arg2[%c0_33, %c0_34] : memref<16x128xf32, #tpu.memory_space<vmem>>, vector<16x128xf32>
      %cst_35 = arith.constant dense<0.000000e+00> : vector<16xf32>
      %75 = vector.multi_reduction <add>, %74, %cst_35 [1] : vector<16x128xf32> to vector<16xf32>
      %76 = vector.shape_cast %75 : vector<16xf32> to vector<16x1xf32>
      %cst_36 = arith.constant 1.280000e+02 : f32
      %77 = vector.broadcast %cst_36 : f32 to vector<16x1xf32>
      %78 = arith.divf %76, %77 : vector<16x1xf32>
      %79 = vector.broadcast %78 : vector<16x1xf32> to vector<16x128xf32>
      %80 = arith.subf %74, %79 : vector<16x128xf32>
      %81 = arith.mulf %80, %80 : vector<16x128xf32>
      %cst_37 = arith.constant dense<0.000000e+00> : vector<16xf32>
      %82 = vector.multi_reduction <add>, %81, %cst_37 [1] : vector<16x128xf32> to vector<16xf32>
      %83 = vector.shape_cast %82 : vector<16xf32> to vector<16x1xf32>
      %cst_38 = arith.constant 1.280000e+02 : f32
      %84 = vector.broadcast %cst_38 : f32 to vector<16x1xf32>
      %85 = arith.divf %83, %84 : vector<16x1xf32>
      %cst_39 = arith.constant 9.99999974E-6 : f32
      %86 = vector.broadcast %cst_39 : f32 to vector<16x1xf32>
      %87 = arith.addf %85, %86 : vector<16x1xf32>
      %88 = math.rsqrt %87 : vector<16x1xf32>
      %89 = vector.broadcast %88 : vector<16x1xf32> to vector<16x128xf32>
      %90 = arith.mulf %80, %89 : vector<16x128xf32>
      %c0_40 = arith.constant 0 : index
      %c0_41 = arith.constant 0 : index
      %91 = vector.load %arg3[%c0_40, %c0_41] : memref<1x128xf32, #tpu.memory_space<vmem>>, vector<1x128xf32>
      %92 = vector.broadcast %91 : vector<1x128xf32> to vector<16x128xf32>
      %93 = arith.mulf %90, %92 : vector<16x128xf32>
      %c0_42 = arith.constant 0 : index
      %c0_43 = arith.constant 0 : index
      %94 = vector.load %arg4[%c0_42, %c0_43] : memref<1x128xf32, #tpu.memory_space<vmem>>, vector<1x128xf32>
      %95 = vector.broadcast %94 : vector<1x128xf32> to vector<16x128xf32>
      %96 = arith.addf %93, %95 : vector<16x128xf32>
      %97 = arith.cmpf one, %96, %96 : vector<16x128xf32>
      %cst_44 = arith.constant 0.000000e+00 : f32
      %98 = vector.broadcast %cst_44 : f32 to vector<16x128xf32>
      %99 = arith.select %97, %98, %96 : vector<16x128xi1>, vector<16x128xf32>
      %100 = math.absf %99 : vector<16x128xf32>
      %cst_45 = arith.constant 0x7F800000 : f32
      %101 = vector.broadcast %cst_45 : f32 to vector<16x128xf32>
      %102 = arith.cmpf oeq, %100, %101 : vector<16x128xf32>
      %cst_46 = arith.constant 0.000000e+00 : f32
      %103 = vector.broadcast %cst_46 : f32 to vector<16x128xf32>
      %104 = arith.cmpf ogt, %99, %103 : vector<16x128xf32>
      %cst_47 = arith.constant 1.000000e+00 : f32
      %cst_48 = arith.constant -1.000000e+00 : f32
      %105 = vector.broadcast %cst_47 : f32 to vector<16x128xf32>
      %106 = vector.broadcast %cst_48 : f32 to vector<16x128xf32>
      %107 = arith.select %104, %105, %106 : vector<16x128xi1>, vector<16x128xf32>
      %108 = arith.select %102, %107, %99 : vector<16x128xi1>, vector<16x128xf32>
      %109 = arith.truncf %108 : vector<16x128xf32> to vector<16x128xbf16>
      %c0_49 = arith.constant 0 : index
      %c0_50 = arith.constant 0 : index
      %110 = vector.load %arg10[%c0_49, %c0_50] : memref<16x128xbf16, #tpu.memory_space<vmem>>, vector<16x128xbf16>
      tpu.vector_store %arg10[%c0_49, %c0_50], %109 {strides = array<i32>} : memref<16x128xbf16, #tpu.memory_space<vmem>>, vector<16x128xbf16>,
      %cst_51 = arith.constant 0.000000e+00 : f32
      %111 = vector.broadcast %cst_51 : f32 to vector<16x128xf32>
      %c0_52 = arith.constant 0 : index
      %c0_53 = arith.constant 0 : index
      %112 = vector.load %arg11[%c0_52, %c0_53] : memref<16x128xf32, #tpu.memory_space<vmem>>, vector<16x128xf32>
      tpu.vector_store %arg11[%c0_52, %c0_53], %111 {strides = array<i32>} : memref<16x128xf32, #tpu.memory_space<vmem>>, vector<16x128xf32>,
    } else {
    }
    %c1024_i32 = arith.constant 1024 : i32
    %3 = arith.muli %arg1, %c1024_i32 : i32
    %4 = tpu.assume_multiple %3, 128 : i32
    %5 = arith.index_cast %4 : i32 to index
    %c0 = arith.constant 0 : index
    %6 = vector.load %arg5[%5, %c0] : memref<1024x128xbf16, #tpu.memory_space<vmem>>, vector<1024x128xbf16>
    %7 = arith.index_cast %4 : i32 to index
    %c0_1 = arith.constant 0 : index
    %8 = vector.load %arg7[%7, %c0_1] : memref<1024x128xbf16, #tpu.memory_space<vmem>>, vector<1024x128xbf16>
    %c0_2 = arith.constant 0 : index
    %c0_3 = arith.constant 0 : index
    %9 = vector.load %arg10[%c0_2, %c0_3] : memref<16x128xbf16, #tpu.memory_space<vmem>>, vector<16x128xbf16>
    %cst = arith.constant dense<0.000000e+00> : vector<16x1024xf32>
    %10 = tpu.matmul %9, %6, %cst {dimension_numbers = #tpu.dot_dimension_numbers<[1], [1], [0], [0], [0, 0, 1, 0], [], []>} : vector<16x128xbf16>, vector<1024x128xbf16>, vector<16x1024xf32> -> vector<16x1024xf32>
    %c0_4 = arith.constant 0 : index
    %c0_5 = arith.constant 0 : index
    %11 = vector.load %arg6[%c0_4, %c0_5] : memref<1x1024xf32, #tpu.memory_space<vmem>>, vector<1x1024xf32>
    %12 = vector.broadcast %11 : vector<1x1024xf32> to vector<16x1024xf32>
    %13 = arith.addf %10, %12 : vector<16x1024xf32>
    %14 = arith.cmpf one, %13, %13 : vector<16x1024xf32>
    %cst_6 = arith.constant 0.000000e+00 : f32
    %15 = vector.broadcast %cst_6 : f32 to vector<16x1024xf32>
    %16 = arith.select %14, %15, %13 : vector<16x1024xi1>, vector<16x1024xf32>
    %17 = math.absf %16 : vector<16x1024xf32>
    %cst_7 = arith.constant 0x7F800000 : f32
    %18 = vector.broadcast %cst_7 : f32 to vector<16x1024xf32>
    %19 = arith.cmpf oeq, %17, %18 : vector<16x1024xf32>
    %cst_8 = arith.constant 0.000000e+00 : f32
    %20 = vector.broadcast %cst_8 : f32 to vector<16x1024xf32>
    %21 = arith.cmpf ogt, %16, %20 : vector<16x1024xf32>
    %cst_9 = arith.constant 5.000000e+00 : f32
    %cst_10 = arith.constant -5.000000e+00 : f32
    %22 = vector.broadcast %cst_9 : f32 to vector<16x1024xf32>
    %23 = vector.broadcast %cst_10 : f32 to vector<16x1024xf32>
    %24 = arith.select %21, %22, %23 : vector<16x1024xi1>, vector<16x1024xf32>
    %25 = arith.select %19, %24, %16 : vector<16x1024xi1>, vector<16x1024xf32>
    %26 = arith.truncf %25 : vector<16x1024xf32> to vector<16x1024xbf16>
    %cst_11 = arith.constant 5.000000e-01 : bf16
    %27 = vector.broadcast %cst_11 : bf16 to vector<16x1024xbf16>
    %28 = arith.mulf %27, %26 : vector<16x1024xbf16>
    %cst_12 = arith.constant 7.070310e-01 : bf16
    %29 = vector.broadcast %cst_12 : bf16 to vector<16x1024xbf16>
    %30 = arith.mulf %26, %29 : vector<16x1024xbf16>
    %31 = math.absf %30 : vector<16x1024xbf16>
    %cst_13 = arith.constant 3.281250e-01 : bf16
    %32 = vector.broadcast %cst_13 : bf16 to vector<16x1024xbf16>
    %33 = arith.mulf %32, %31 : vector<16x1024xbf16>
    %cst_14 = arith.constant 1.000000e+00 : bf16
    %34 = vector.broadcast %cst_14 : bf16 to vector<16x1024xbf16>
    %35 = arith.addf %34, %33 : vector<16x1024xbf16>
    %cst_15 = arith.constant 1.000000e+00 : bf16
    %36 = vector.broadcast %cst_15 : bf16 to vector<16x1024xbf16>
    %37 = arith.divf %36, %35 : vector<16x1024xbf16>
    %cst_16 = arith.constant 1.062500e+00 : bf16
    %38 = vector.broadcast %cst_16 : bf16 to vector<16x1024xbf16>
    %39 = arith.mulf %38, %37 : vector<16x1024xbf16>
    %cst_17 = arith.constant -1.453130e+00 : bf16
    %40 = vector.broadcast %cst_17 : bf16 to vector<16x1024xbf16>
    %41 = arith.addf %39, %40 : vector<16x1024xbf16>
    %42 = arith.mulf %41, %37 : vector<16x1024xbf16>
    %cst_18 = arith.constant 1.421880e+00 : bf16
    %43 = vector.broadcast %cst_18 : bf16 to vector<16x1024xbf16>
    %44 = arith.addf %42, %43 : vector<16x1024xbf16>
    %45 = arith.mulf %44, %37 : vector<16x1024xbf16>
    %cst_19 = arith.constant -2.851560e-01 : bf16
    %46 = vector.broadcast %cst_19 : bf16 to vector<16x1024xbf16>
    %47 = arith.addf %45, %46 : vector<16x1024xbf16>
    %48 = arith.mulf %47, %37 : vector<16x1024xbf16>
    %cst_20 = arith.constant 2.539060e-01 : bf16
    %49 = vector.broadcast %cst_20 : bf16 to vector<16x1024xbf16>
    %50 = arith.addf %48, %49 : vector<16x1024xbf16>
    %51 = arith.mulf %50, %37 : vector<16x1024xbf16>
    %52 = arith.mulf %31, %31 : vector<16x1024xbf16>
    %cst_21 = arith.constant 0.000000e+00 : bf16
    %53 = vector.broadcast %cst_21 : bf16 to vector<16x1024xbf16>
    %54 = arith.subf %53, %52 : vector<16x1024xbf16>
    %55 = math.exp %54 : vector<16x1024xbf16>
    %56 = arith.mulf %51, %55 : vector<16x1024xbf16>
    %cst_22 = arith.constant 1.000000e+00 : bf16
    %57 = vector.broadcast %cst_22 : bf16 to vector<16x1024xbf16>
    %58 = arith.subf %57, %56 : vector<16x1024xbf16>
    %cst_23 = arith.constant 0.000000e+00 : bf16
    %59 = vector.broadcast %cst_23 : bf16 to vector<16x1024xbf16>
    %60 = arith.cmpf olt, %30, %59 : vector<16x1024xbf16>
    %cst_24 = arith.constant 0.000000e+00 : bf16
    %61 = vector.broadcast %cst_24 : bf16 to vector<16x1024xbf16>
    %62 = arith.subf %61, %58 : vector<16x1024xbf16>
    %63 = arith.select %60, %62, %58 : vector<16x1024xi1>, vector<16x1024xbf16>
    %cst_25 = arith.constant 1.000000e+00 : bf16
    %64 = vector.broadcast %cst_25 : bf16 to vector<16x1024xbf16>
    %65 = arith.addf %64, %63 : vector<16x1024xbf16>
    %66 = arith.mulf %28, %65 : vector<16x1024xbf16>
    %c0_26 = arith.constant 0 : index
    %c0_27 = arith.constant 0 : index
    %67 = vector.load %arg11[%c0_26, %c0_27] : memref<16x128xf32, #tpu.memory_space<vmem>>, vector<16x128xf32>
    %cst_28 = arith.constant dense<0.000000e+00> : vector<16x128xf32>
    %68 = tpu.matmul %66, %8, %cst_28 {dimension_numbers = #tpu.dot_dimension_numbers<[1], [0], [0], [1], [0, 0, 1, 1], [], []>} : vector<16x1024xbf16>, vector<1024x128xbf16>, vector<16x128xf32> -> vector<16x128xf32>
    %69 = arith.addf %67, %68 : vector<16x128xf32>
    %c0_29 = arith.constant 0 : index
    %c0_30 = arith.constant 0 : index
    %70 = vector.load %arg11[%c0_29, %c0_30] : memref<16x128xf32, #tpu.memory_space<vmem>>, vector<16x128xf32>
    tpu.vector_store %arg11[%c0_29, %c0_30], %69 {strides = array<i32>} : memref<16x128xf32, #tpu.memory_space<vmem>>, vector<16x128xf32>,
    %c0_i32_31 = arith.constant 0 : i32
    %71 = arith.cmpi eq, %arg1, %c0_i32_31 : i32
    %72 = arith.extui %71 : i1 to i32
    %c0_i32_32 = arith.constant 0 : i32
    %73 = arith.cmpi ne, %72, %c0_i32_32 : i32
    scf.if %73 {
      %c0_33 = arith.constant 0 : index
      %c0_34 = arith.constant 0 : index
      %74 = vector.load %arg11[%c0_33, %c0_34] : memref<16x128xf32, #tpu.memory_space<vmem>>, vector<16x128xf32>
      %c0_35 = arith.constant 0 : index
      %c0_36 = arith.constant 0 : index
      %75 = vector.load %arg8[%c0_35, %c0_36] : memref<1x128xf32, #tpu.memory_space<vmem>>, vector<1x128xf32>
      %76 = vector.broadcast %75 : vector<1x128xf32> to vector<16x128xf32>
      %77 = arith.addf %74, %76 : vector<16x128xf32>
      %78 = arith.cmpf one, %77, %77 : vector<16x128xf32>
      %cst_37 = arith.constant 0.000000e+00 : f32
      %79 = vector.broadcast %cst_37 : f32 to vector<16x128xf32>
      %80 = arith.select %78, %79, %77 : vector<16x128xi1>, vector<16x128xf32>
      %81 = math.absf %80 : vector<16x128xf32>
      %cst_38 = arith.constant 0x7F800000 : f32
      %82 = vector.broadcast %cst_38 : f32 to vector<16x128xf32>
      %83 = arith.cmpf oeq, %81, %82 : vector<16x128xf32>
      %cst_39 = arith.constant 0.000000e+00 : f32
      %84 = vector.broadcast %cst_39 : f32 to vector<16x128xf32>
      %85 = arith.cmpf ogt, %80, %84 : vector<16x128xf32>
      %cst_40 = arith.constant 5.000000e+00 : f32
      %cst_41 = arith.constant -5.000000e+00 : f32
      %86 = vector.broadcast %cst_40 : f32 to vector<16x128xf32>
      %87 = vector.broadcast %cst_41 : f32 to vector<16x128xf32>
      %88 = arith.select %85, %86, %87 : vector<16x128xi1>, vector<16x128xf32>
      %89 = arith.select %83, %88, %80 : vector<16x128xi1>, vector<16x128xf32>
      %c0_42 = arith.constant 0 : index
      %c0_43 = arith.constant 0 : index
      %90 = vector.load %arg2[%c0_42, %c0_43] : memref<16x128xf32, #tpu.memory_space<vmem>>, vector<16x128xf32>
      %91 = arith.addf %90, %89 : vector<16x128xf32>
      %92 = arith.cmpf one, %91, %91 : vector<16x128xf32>
      %cst_44 = arith.constant 0.000000e+00 : f32
      %93 = vector.broadcast %cst_44 : f32 to vector<16x128xf32>
      %94 = arith.select %92, %93, %91 : vector<16x128xi1>, vector<16x128xf32>
      %95 = math.absf %94 : vector<16x128xf32>
      %cst_45 = arith.constant 0x7F800000 : f32
      %96 = vector.broadcast %cst_45 : f32 to vector<16x128xf32>
      %97 = arith.cmpf oeq, %95, %96 : vector<16x128xf32>
      %cst_46 = arith.constant 0.000000e+00 : f32
      %98 = vector.broadcast %cst_46 : f32 to vector<16x128xf32>
      %99 = arith.cmpf ogt, %94, %98 : vector<16x128xf32>
      %cst_47 = arith.constant 5.000000e+00 : f32
      %cst_48 = arith.constant -5.000000e+00 : f32
      %100 = vector.broadcast %cst_47 : f32 to vector<16x128xf32>
      %101 = vector.broadcast %cst_48 : f32 to vector<16x128xf32>
      %102 = arith.select %99, %100, %101 : vector<16x128xi1>, vector<16x128xf32>
      %103 = arith.select %97, %102, %94 : vector<16x128xi1>, vector<16x128xf32>
      %c0_49 = arith.constant 0 : index
      %c0_50 = arith.constant 0 : index
      %104 = vector.load %arg9[%c0_49, %c0_50] : memref<16x128xf32, #tpu.memory_space<vmem>>, vector<16x128xf32>
      tpu.vector_store %arg9[%c0_49, %c0_50], %103 {strides = array<i32>} : memref<16x128xf32, #tpu.memory_space<vmem>>, vector<16x128xf32>,
    } else {
    }
    return
  }
  func.func @transform_0(%arg0: i32, %arg1: i32) -> (i32, i32) {
    %c0_i32 = arith.constant 0 : i32
    %c0_i32_0 = arith.constant 0 : i32
    return %arg0, %c0_i32 : i32, i32
  }
  func.func @transform_1(%arg0: i32, %arg1: i32) -> (i32, i32) {
    %c0_i32 = arith.constant 0 : i32
    %c0_i32_0 = arith.constant 0 : i32
    %c0_i32_1 = arith.constant 0 : i32
    return %c0_i32, %c0_i32_0 : i32, i32
  }
  func.func @transform_2(%arg0: i32, %arg1: i32) -> (i32, i32) {
    %c0_i32 = arith.constant 0 : i32
    %c0_i32_0 = arith.constant 0 : i32
    %c0_i32_1 = arith.constant 0 : i32
    return %c0_i32, %c0_i32_0 : i32, i32
  }
  func.func @transform_3(%arg0: i32, %arg1: i32) -> (i32, i32) {
    %c0_i32 = arith.constant 0 : i32
    %c0_i32_0 = arith.constant 0 : i32
    %c0_i32_1 = arith.constant 0 : i32
    return %c0_i32, %c0_i32_0 : i32, i32
  }
  func.func @transform_4(%arg0: i32, %arg1: i32) -> (i32, i32) {
    %c0_i32 = arith.constant 0 : i32
    %c0_i32_0 = arith.constant 0 : i32
    return %c0_i32, %arg1 : i32, i32
  }
  func.func @transform_5(%arg0: i32, %arg1: i32) -> (i32, i32) {
    %c0_i32 = arith.constant 0 : i32
    %c0_i32_0 = arith.constant 0 : i32
    %c0_i32_1 = arith.constant 0 : i32
    return %c0_i32, %c0_i32_0 : i32, i32
  }
  func.func @transform_6(%arg0: i32, %arg1: i32) -> (i32, i32) {
    %c0_i32 = arith.constant 0 : i32
    %c0_i32_0 = arith.constant 0 : i32
    %c0_i32_1 = arith.constant 0 : i32
    return %c0_i32, %c0_i32_0 : i32, i32
  }
  func.func @transform_7(%arg0: i32, %arg1: i32) -> (i32, i32) {
    %c0_i32 = arith.constant 0 : i32
    %c0_i32_0 = arith.constant 0 : i32
    return %arg0, %c0_i32 : i32, i32
  }
}

</mosaic_0001>

<llo_original>
// kernel: tpu_custom_call.1
$region0: #{tpu_custom_call.1}
  #allocation0 [shape = 'u32[]', space=smem, size = 0x4, offset = 0x4, fixed_abs, tag = 'smem constant byte address 0x4 - core index']
  #allocation1 [shape = 'u32[144,128]{1,0:T(1,128)}', space=vmem, size = 0x12000, scoped, tag = 'internal scratch']
  #allocation2 [shape = 'bf16[16,128]{1,0:T(8,128)(2,1)}', space=vmem, size = 0x1000, scoped, tag = 'scratch operand']
  #allocation3 [shape = 'f32[16,128]{1,0:T(8,128)}', space=vmem, size = 0x2000, scoped, tag = 'scratch operand']
  %s0 = inlined_call_operand.hbm [shape: f32[16,128], index: 0, kind: input, shape index: {}]
  %s1 = inlined_call_operand.vmem [shape: f32[1,128], index: 1, kind: input, shape index: {}]
  %s2 = inlined_call_operand.vmem [shape: f32[1,128], index: 2, kind: input, shape index: {}]
  %s3 = inlined_call_operand.hbm [shape: bf16[1024,128], index: 3, kind: input, shape index: {}]
  %s4 = inlined_call_operand.hbm [shape: f32[1,1024], index: 4, kind: input, shape index: {}]
  %s5 = inlined_call_operand.hbm [shape: bf16[1024,128], index: 5, kind: input, shape index: {}]
  %s6 = inlined_call_operand.vmem [shape: f32[1,128], index: 6, kind: input, shape index: {}]
  %s7 = inlined_call_operand.hbm [shape: f32[16,128], index: 7, kind: output, shape index: {}]
  %s8 = sld [smem:[#allocation0]]
  $region62: #{tpu_custom_call.1} parent=0
    _
  %s10 = ssub.s32 1, %s8
  %s11 = scalar_select 0, %s10, %s8
  $region1: #{tpu_custom_call.1} parent=0
    #allocation4 [shape = 'u8[8192]{0}', space=vmem, size = 0x2000, scoped, tag = 'input window, operand 0, single buffered']
    #allocation5 [shape = 's32[1]{0}', space=sflag, size = 0x4, scoped, tag = 'scoped memory for tpu_custom_call.1']
    #allocation6 [shape = 's32[1]{0}', space=sflag, size = 0x4, scoped, tag = 'scoped memory for tpu_custom_call.1']
    #allocation7 [shape = 'u8[262144]{0}', space=vmem, size = 0x40000, scoped, tag = 'input window, operand 3, single buffered']
    #allocation8 [shape = 's32[1]{0}', space=sflag, size = 0x4, scoped, tag = 'scoped memory for tpu_custom_call.1']
    #allocation9 [shape = 'u8[4096]{0}', space=vmem, size = 0x1000, scoped, tag = 'input window, operand 4, single buffered']
    #allocation10 [shape = 'u8[262144]{0}', space=vmem, size = 0x40000, scoped, tag = 'input window, operand 5, single buffered']
    #allocation11 [shape = 's32[1]{0}', space=sflag, size = 0x4, scoped, tag = 'scoped memory for tpu_custom_call.1']
    #allocation12 [shape = 'u8[8192]{0}', space=vmem, size = 0x2000, scoped, tag = 'output window, operand 0, single buffered']
    %12 = vsyncpa [#allocation5], 0
    %13 = vsyncpa [#allocation8], 0
    %14 = vsyncpa [#allocation11], 0
    %15 = vsyncpa [#allocation6], 0
    // Predicated region
    $region2: #{tpu_custom_call.1} parent=1 // pred_check
      _
    $region3: #{tpu_custom_call.1} parent=1 // pred_check_branch
      %17 = sbr.rel (0) target = $region5
    $region4: #{tpu_custom_call.1} parent=1 // pred_region
      %s19 = ssub.s32 256, 256
      %20 = vsyncadd [#allocation5], %s19
      %s21 = sshll.u32 [#allocation4], 4
      %s22 = int_to_ptr.vmem [resolvable:$true] %s21
      %27 = dma.hbm_to_vmem [thread:$0]  %s0, 256, %s22, [#allocation5], 128, 128, 8
    $region5: #{tpu_custom_call.1} parent=1 // pred_fallthru
      _
    // Predicated region
    $region6: #{tpu_custom_call.1} parent=1 // pred_check
      _
    $region7: #{tpu_custom_call.1} parent=1 // pred_check_branch
      %29 = sbr.rel (0) target = $region9
    $region8: #{tpu_custom_call.1} parent=1 // pred_region
      _
    $region9: #{tpu_custom_call.1} parent=1 // pred_fallthru
      _
    // Predicated region
    $region10: #{tpu_custom_call.1} parent=1 // pred_check
      _
    $region11: #{tpu_custom_call.1} parent=1 // pred_check_branch
      %31 = sbr.rel (0) target = $region13
    $region12: #{tpu_custom_call.1} parent=1 // pred_region
      _
    $region13: #{tpu_custom_call.1} parent=1 // pred_fallthru
      _
    // Predicated region
    $region14: #{tpu_custom_call.1} parent=1 // pred_check
      _
    $region15: #{tpu_custom_call.1} parent=1 // pred_check_branch
      %33 = sbr.rel (0) target = $region17
    $region16: #{tpu_custom_call.1} parent=1 // pred_region
      %s35 = ssub.s32 8192, 8192
      %36 = vsyncadd [#allocation8], %s35
      %s37 = sshll.u32 [#allocation7], 4
      %s38 = int_to_ptr.vmem [resolvable:$true] %s37
      %43 = dma.hbm_to_vmem [thread:$0]  %s3, 8192, %s38, [#allocation8], 64, 64, 4
    $region17: #{tpu_custom_call.1} parent=1 // pred_fallthru
      _
    // Predicated region
    $region18: #{tpu_custom_call.1} parent=1 // pred_check
      _
    $region19: #{tpu_custom_call.1} parent=1 // pred_check_branch
      %45 = sbr.rel (0) target = $region21
    $region20: #{tpu_custom_call.1} parent=1 // pred_region
      %s47 = ssub.s32 128, 128
      %48 = vsyncadd [#allocation8], %s47
      %s50 = sshll.u32 [#allocation9], 4
      %s51 = int_to_ptr.vmem [resolvable:$true] %s50
      %53 = dma.hbm_to_vmem [thread:$0]  %s4, 128, %s51, [#allocation8]
    $region21: #{tpu_custom_call.1} parent=1 // pred_fallthru
      _
    // Predicated region
    $region22: #{tpu_custom_call.1} parent=1 // pred_check
      _
    $region23: #{tpu_custom_call.1} parent=1 // pred_check_branch
      %55 = sbr.rel (0) target = $region25
    $region24: #{tpu_custom_call.1} parent=1 // pred_region
      %s57 = ssub.s32 8192, 8192
      %58 = vsyncadd [#allocation11], %s57
      %s59 = sshll.u32 [#allocation10], 4
      %s60 = int_to_ptr.vmem [resolvable:$true] %s59
      %65 = dma.hbm_to_vmem [thread:$0]  %s5, 8192, %s60, [#allocation11], 64, 64, 4
    $region25: #{tpu_custom_call.1} parent=1 // pred_fallthru
      _
    // Predicated region
    $region26: #{tpu_custom_call.1} parent=1 // pred_check
      _
    $region27: #{tpu_custom_call.1} parent=1 // pred_check_branch
      %67 = sbr.rel (0) target = $region29
    $region28: #{tpu_custom_call.1} parent=1 // pred_region
      _
    $region29: #{tpu_custom_call.1} parent=1 // pred_fallthru
      _
    // Predicated region
    $region30: #{tpu_custom_call.1} parent=1 // pred_check
      _
    $region31: #{tpu_custom_call.1} parent=1 // pred_check_branch
      %69 = sbr.rel (0) target = $region33
    $region32: #{tpu_custom_call.1} parent=1 // pred_region
      %70 = dma.done [#allocation5], 256
    $region33: #{tpu_custom_call.1} parent=1 // pred_fallthru
      _
    // Predicated region
    $region34: #{tpu_custom_call.1} parent=1 // pred_check
      _
    $region35: #{tpu_custom_call.1} parent=1 // pred_check_branch
      %72 = sbr.rel (0) target = $region37
    $region36: #{tpu_custom_call.1} parent=1 // pred_region
      %73 = dma.done [#allocation8], 8192
    $region37: #{tpu_custom_call.1} parent=1 // pred_fallthru
      _
    // Predicated region
    $region38: #{tpu_custom_call.1} parent=1 // pred_check
      _
    $region39: #{tpu_custom_call.1} parent=1 // pred_check_branch
      %75 = sbr.rel (0) target = $region41
    $region40: #{tpu_custom_call.1} parent=1 // pred_region
      %76 = dma.done [#allocation8], 128
    $region41: #{tpu_custom_call.1} parent=1 // pred_fallthru
      _
    // Predicated region
    $region42: #{tpu_custom_call.1} parent=1 // pred_check
      _
    $region43: #{tpu_custom_call.1} parent=1 // pred_check_branch
      %78 = sbr.rel (0) target = $region45
    $region44: #{tpu_custom_call.1} parent=1 // pred_region
      %79 = dma.done [#allocation11], 8192
    $region45: #{tpu_custom_call.1} parent=1 // pred_fallthru
      _
    %p90 = scmp.eq.s32.totalorder 0, 0
    // Predicated region
    $region46: #{tpu_custom_call.1} parent=1 // pred_check
      %p91 = pneg %p90
    $region47: #{tpu_custom_call.1} parent=1 // pred_check_branch
      %93 = sbr.rel (%p91) target = $region49
    $region48: #{tpu_custom_call.1} parent=1 // pred_region
      %v94 = vld [vmem:[#allocation4] sm:$0xff]
      %v95 = vld [vmem:[#allocation4 + $0x8] sm:$0xff]
      %96 = vadd.xlane.f32.xlu0 %v94
      %v97 = vpop.xlane.xlu0 %96
      %98 = vadd.xlane.f32.xlu0 %v95
      %v99 = vpop.xlane.xlu0 %98
      %v100 = vrcp.pop 128.0
      %v101 = vmul.f32 %v97, %v100
      %v102 = vmul.f32 %v99, %v100
      %v103 = vsub.f32 %v94, %v101
      %v104 = vsub.f32 %v95, %v102
      %v105 = vmul.f32 %v103, %v103
      %v106 = vmul.f32 %v104, %v104
      %107 = vadd.xlane.f32.xlu0 %v105
      %v108 = vpop.xlane.xlu0 %107
      %109 = vadd.xlane.f32.xlu0 %v106
      %v110 = vpop.xlane.xlu0 %109
      %v111 = vmul.f32 %v108, %v100
      %v112 = vmul.f32 %v110, %v100
      %v113 = vadd.f32 %v111, 1e-05
      %v114 = vadd.f32 %v112, 1e-05
      %v115 = vrsqrt.pop %v113
      %v116 = vrsqrt.pop %v114
      %v117 = vmul.f32 %v103, %v115
      %v118 = vmul.f32 %v104, %v116
      %v119 = vld [vmem:[%s1] sm:$0x1]
      %v121 = vlaneseq
      %v122 = vshrl.u32 %v121, 7
      %v123 = vsub.s32 0, %v122
      %v124 = vrot.slane %v119, %v123
      %v126 = vmul.f32 %v117, %v124
      %v127 = vmul.f32 %v118, %v124
      %v128 = vld [vmem:[%s2] sm:$0x1]
      %v130 = vlaneseq
      %v131 = vshrl.u32 %v130, 7
      %v132 = vsub.s32 0, %v131
      %v133 = vrot.slane %v128, %v132
      %v135 = vadd.f32 %v126, %v133
      %v136 = vadd.f32 %v127, %v133
      %vm137 = vcmp.ne.f32.partialorder %v135, %v135
      %vm138 = vcmp.ne.f32.partialorder %v136, %v136
      %v139 = vsel %vm137, 0.0, %v135
      %v140 = vsel %vm138, 0.0, %v136
      %v141 = vand.u32 2147483647, %v139
      %v142 = vand.u32 2147483647, %v140
      %vm143 = vcmp.eq.f32.partialorder %v141, inf
      %vm144 = vcmp.eq.f32.partialorder %v142, inf
      %vm145 = vcmp.gt.f32.partialorder %v139, 0.0
      %vm146 = vcmp.gt.f32.partialorder %v140, 0.0
      %v147 = vsel %vm145, 1.0, -1.0
      %v148 = vsel %vm146, 1.0, -1.0
      %v149 = vsel %vm143, %v147, %v139
      %v150 = vsel %vm144, %v148, %v140
      %v151 = vpack.c.bf16 %v150, %v149
      %v153 = vunpack.c.l.b16 %v151
      %v154 = vunpack.c.h.b16 %v151
      %v155 = vpack.c.b16 %v153, %v153
      %v156 = vpack.c.b16 %v154, %v154
      %159 = vst [vmem:[#allocation2] sm:$0xf] %v155
      %160 = vst [vmem:[#allocation2 + $0x4] sm:$0xf] %v156
      %161 = vst [vmem:[#allocation3] sm:$0xff] 0.0
      %162 = vst [vmem:[#allocation3 + $0x8] sm:$0xff] 0.0
    $region49: #{tpu_custom_call.1} parent=1 // pred_fallthru
      _
    %s163 = smul.u32 0, 1024
    %s164 = sshra.s32 %s163, 3
    %s165 = sand.u32 %s163, 7
    %s166 = smul.addr %s164, 4
    %s167 = scalar_lea.vmem [#allocation7], %s166
    %v168 = vld [vmem:[%s167] sm:$0xf]
    %v169 = vld [vmem:[%s167 + $0x4] sm:$0xf]
    %v170 = vld [vmem:[%s167 + $0x8] sm:$0xf]
    %v171 = vld [vmem:[%s167 + $0xc] sm:$0xf]
    %v172 = vld [vmem:[%s167 + $0x10] sm:$0xf]
    %v173 = vld [vmem:[%s167 + $0x14] sm:$0xf]
    %v174 = vld [vmem:[%s167 + $0x18] sm:$0xf]
    %v175 = vld [vmem:[%s167 + $0x1c] sm:$0xf]
    %v176 = vld [vmem:[%s167 + $0x20] sm:$0xf]
    %v177 = vld [vmem:[%s167 + $0x24] sm:$0xf]
    %v178 = vld [vmem:[%s167 + $0x28] sm:$0xf]
    %v179 = vld [vmem:[%s167 + $0x2c] sm:$0xf]
    %v180 = vld [vmem:[%s167 + $0x30] sm:$0xf]
    %v181 = vld [vmem:[%s167 + $0x34] sm:$0xf]
    %v182 = vld [vmem:[%s167 + $0x38] sm:$0xf]
    %v183 = vld [vmem:[%s167 + $0x3c] sm:$0xf]
    %v184 = vld [vmem:[%s167 + $0x40] sm:$0xf]
    %v185 = vld [vmem:[%s167 + $0x44] sm:$0xf]
    %v186 = vld [vmem:[%s167 + $0x48] sm:$0xf]
    %v187 = vld [vmem:[%s167 + $0x4c] sm:$0xf]
    %v188 = vld [vmem:[%s167 + $0x50] sm:$0xf]
    %v189 = vld [vmem:[%s167 + $0x54] sm:$0xf]
    %v190 = vld [vmem:[%s167 + $0x58] sm:$0xf]
    %v191 = vld [vmem:[%s167 + $0x5c] sm:$0xf]
    %v192 = vld [vmem:[%s167 + $0x60] sm:$0xf]
    %v193 = vld [vmem:[%s167 + $0x64] sm:$0xf]
    %v194 = vld [vmem:[%s167 + $0x68] sm:$0xf]
    %v195 = vld [vmem:[%s167 + $0x6c] sm:$0xf]
    %v196 = vld [vmem:[%s167 + $0x70] sm:$0xf]
    %v197 = vld [vmem:[%s167 + $0x74] sm:$0xf]
    %v198 = vld [vmem:[%s167 + $0x78] sm:$0xf]
    %v199 = vld [vmem:[%s167 + $0x7c] sm:$0xf]
    %v200 = vld [vmem:[%s167 + $0x80] sm:$0xf]
    %v201 = vld [vmem:[%s167 + $0x84] sm:$0xf]
    %v202 = vld [vmem:[%s167 + $0x88] sm:$0xf]
    %v203 = vld [vmem:[%s167 + $0x8c] sm:$0xf]
    %v204 = vld [vmem:[%s167 + $0x90] sm:$0xf]
    %v205 = vld [vmem:[%s167 + $0x94] sm:$0xf]
    %v206 = vld [vmem:[%s167 + $0x98] sm:$0xf]
    %v207 = vld [vmem:[%s167 + $0x9c] sm:$0xf]
    %v208 = vld [vmem:[%s167 + $0xa0] sm:$0xf]
    %v209 = vld [vmem:[%s167 + $0xa4] sm:$0xf]
    %v210 = vld [vmem:[%s167 + $0xa8] sm:$0xf]
    %v211 = vld [vmem:[%s167 + $0xac] sm:$0xf]
    %v212 = vld [vmem:[%s167 + $0xb0] sm:$0xf]
    %v213 = vld [vmem:[%s167 + $0xb4] sm:$0xf]
    %v214 = vld [vmem:[%s167 + $0xb8] sm:$0xf]
    %v215 = vld [vmem:[%s167 + $0xbc] sm:$0xf]
    %v216 = vld [vmem:[%s167 + $0xc0] sm:$0xf]
    %v217 = vld [vmem:[%s167 + $0xc4] sm:$0xf]
    %v218 = vld [vmem:[%s167 + $0xc8] sm:$0xf]
    %v219 = vld [vmem:[%s167 + $0xcc] sm:$0xf]
    %v220 = vld [vmem:[%s167 + $0xd0] sm:$0xf]
    %v221 = vld [vmem:[%s167 + $0xd4] sm:$0xf]
    %v222 = vld [vmem:[%s167 + $0xd8] sm:$0xf]
    %v223 = vld [vmem:[%s167 + $0xdc] sm:$0xf]
    %v224 = vld [vmem:[%s167 + $0xe0] sm:$0xf]
    %v225 = vld [vmem:[%s167 + $0xe4] sm:$0xf]
    %v226 = vld [vmem:[%s167 + $0xe8] sm:$0xf]
    %v227 = vld [vmem:[%s167 + $0xec] sm:$0xf]
    %v228 = vld [vmem:[%s167 + $0xf0] sm:$0xf]
    %v229 = vld [vmem:[%s167 + $0xf4] sm:$0xf]
    %v230 = vld [vmem:[%s167 + $0xf8] sm:$0xf]
    %v231 = vld [vmem:[%s167 + $0xfc] sm:$0xf]
    %v232 = vld [vmem:[%s167 + $0x100] sm:$0xf]
    %v233 = vld [vmem:[%s167 + $0x104] sm:$0xf]
    %v234 = vld [vmem:[%s167 + $0x108] sm:$0xf]
    %v235 = vld [vmem:[%s167 + $0x10c] sm:$0xf]
    %v236 = vld [vmem:[%s167 + $0x110] sm:$0xf]
    %v237 = vld [vmem:[%s167 + $0x114] sm:$0xf]
    %v238 = vld [vmem:[%s167 + $0x118] sm:$0xf]
    %v239 = vld [vmem:[%s167 + $0x11c] sm:$0xf]
    %v240 = vld [vmem:[%s167 + $0x120] sm:$0xf]
    %v241 = vld [vmem:[%s167 + $0x124] sm:$0xf]
    %v242 = vld [vmem:[%s167 + $0x128] sm:$0xf]
    %v243 = vld [vmem:[%s167 + $0x12c] sm:$0xf]
    %v244 = vld [vmem:[%s167 + $0x130] sm:$0xf]
    %v245 = vld [vmem:[%s167 + $0x134] sm:$0xf]
    %v246 = vld [vmem:[%s167 + $0x138] sm:$0xf]
    %v247 = vld [vmem:[%s167 + $0x13c] sm:$0xf]
    %v248 = vld [vmem:[%s167 + $0x140] sm:$0xf]
    %v249 = vld [vmem:[%s167 + $0x144] sm:$0xf]
    %v250 = vld [vmem:[%s167 + $0x148] sm:$0xf]
    %v251 = vld [vmem:[%s167 + $0x14c] sm:$0xf]
    %v252 = vld [vmem:[%s167 + $0x150] sm:$0xf]
    %v253 = vld [vmem:[%s167 + $0x154] sm:$0xf]
    %v254 = vld [vmem:[%s167 + $0x158] sm:$0xf]
    %v255 = vld [vmem:[%s167 + $0x15c] sm:$0xf]
    %v256 = vld [vmem:[%s167 + $0x160] sm:$0xf]
    %v257 = vld [vmem:[%s167 + $0x164] sm:$0xf]
    %v258 = vld [vmem:[%s167 + $0x168] sm:$0xf]
    %v259 = vld [vmem:[%s167 + $0x16c] sm:$0xf]
    %v260 = vld [vmem:[%s167 + $0x170] sm:$0xf]
    %v261 = vld [vmem:[%s167 + $0x174] sm:$0xf]
    %v262 = vld [vmem:[%s167 + $0x178] sm:$0xf]
    %v263 = vld [vmem:[%s167 + $0x17c] sm:$0xf]
    %v264 = vld [vmem:[%s167 + $0x180] sm:$0xf]
    %v265 = vld [vmem:[%s167 + $0x184] sm:$0xf]
    %v266 = vld [vmem:[%s167 + $0x188] sm:$0xf]
    %v267 = vld [vmem:[%s167 + $0x18c] sm:$0xf]
    %v268 = vld [vmem:[%s167 + $0x190] sm:$0xf]
    %v269 = vld [vmem:[%s167 + $0x194] sm:$0xf]
    %v270 = vld [vmem:[%s167 + $0x198] sm:$0xf]
    %v271 = vld [vmem:[%s167 + $0x19c] sm:$0xf]
    %v272 = vld [vmem:[%s167 + $0x1a0] sm:$0xf]
    %v273 = vld [vmem:[%s167 + $0x1a4] sm:$0xf]
    %v274 = vld [vmem:[%s167 + $0x1a8] sm:$0xf]
    %v275 = vld [vmem:[%s167 + $0x1ac] sm:$0xf]
    %v276 = vld [vmem:[%s167 + $0x1b0] sm:$0xf]
    %v277 = vld [vmem:[%s167 + $0x1b4] sm:$0xf]
    %v278 = vld [vmem:[%s167 + $0x1b8] sm:$0xf]
    %v279 = vld [vmem:[%s167 + $0x1bc] sm:$0xf]
    %v280 = vld [vmem:[%s167 + $0x1c0] sm:$0xf]
    %v281 = vld [vmem:[%s167 + $0x1c4] sm:$0xf]
    %v282 = vld [vmem:[%s167 + $0x1c8] sm:$0xf]
    %v283 = vld [vmem:[%s167 + $0x1cc] sm:$0xf]
    %v284 = vld [vmem:[%s167 + $0x1d0] sm:$0xf]
    %v285 = vld [vmem:[%s167 + $0x1d4] sm:$0xf]
    %v286 = vld [vmem:[%s167 + $0x1d8] sm:$0xf]
    %v287 = vld [vmem:[%s167 + $0x1dc] sm:$0xf]
    %v288 = vld [vmem:[%s167 + $0x1e0] sm:$0xf]
    %v289 = vld [vmem:[%s167 + $0x1e4] sm:$0xf]
    %v290 = vld [vmem:[%s167 + $0x1e8] sm:$0xf]
    %v291 = vld [vmem:[%s167 + $0x1ec] sm:$0xf]
    %v292 = vld [vmem:[%s167 + $0x1f0] sm:$0xf]
    %v293 = vld [vmem:[%s167 + $0x1f4] sm:$0xf]
    %v294 = vld [vmem:[%s167 + $0x1f8] sm:$0xf]
    %v295 = vld [vmem:[%s167 + $0x1fc] sm:$0xf]
    %s296 = smul.addr %s164, 4
    %s297 = scalar_lea.vmem [#allocation10], %s296
    %v298 = vld [vmem:[%s297] sm:$0xf]
    %v299 = vld [vmem:[%s297 + $0x4] sm:$0xf]
    %v300 = vld [vmem:[%s297 + $0x8] sm:$0xf]
    %v301 = vld [vmem:[%s297 + $0xc] sm:$0xf]
    %v302 = vld [vmem:[%s297 + $0x10] sm:$0xf]
    %v303 = vld [vmem:[%s297 + $0x14] sm:$0xf]
    %v304 = vld [vmem:[%s297 + $0x18] sm:$0xf]
    %v305 = vld [vmem:[%s297 + $0x1c] sm:$0xf]
    %v306 = vld [vmem:[%s297 + $0x20] sm:$0xf]
    %v307 = vld [vmem:[%s297 + $0x24] sm:$0xf]
    %v308 = vld [vmem:[%s297 + $0x28] sm:$0xf]
    %v309 = vld [vmem:[%s297 + $0x2c] sm:$0xf]
    %v310 = vld [vmem:[%s297 + $0x30] sm:$0xf]
    %v311 = vld [vmem:[%s297 + $0x34] sm:$0xf]
    %v312 = vld [vmem:[%s297 + $0x38] sm:$0xf]
    %v313 = vld [vmem:[%s297 + $0x3c] sm:$0xf]
    %v314 = vld [vmem:[%s297 + $0x40] sm:$0xf]
    %v315 = vld [vmem:[%s297 + $0x44] sm:$0xf]
    %v316 = vld [vmem:[%s297 + $0x48] sm:$0xf]
    %v317 = vld [vmem:[%s297 + $0x4c] sm:$0xf]
    %v318 = vld [vmem:[%s297 + $0x50] sm:$0xf]
    %v319 = vld [vmem:[%s297 + $0x54] sm:$0xf]
    %v320 = vld [vmem:[%s297 + $0x58] sm:$0xf]
    %v321 = vld [vmem:[%s297 + $0x5c] sm:$0xf]
    %v322 = vld [vmem:[%s297 + $0x60] sm:$0xf]
    %v323 = vld [vmem:[%s297 + $0x64] sm:$0xf]
    %v324 = vld [vmem:[%s297 + $0x68] sm:$0xf]
    %v325 = vld [vmem:[%s297 + $0x6c] sm:$0xf]
    %v326 = vld [vmem:[%s297 + $0x70] sm:$0xf]
    %v327 = vld [vmem:[%s297 + $0x74] sm:$0xf]
    %v328 = vld [vmem:[%s297 + $0x78] sm:$0xf]
    %v329 = vld [vmem:[%s297 + $0x7c] sm:$0xf]
    %v330 = vld [vmem:[%s297 + $0x80] sm:$0xf]
    %v331 = vld [vmem:[%s297 + $0x84] sm:$0xf]
    %v332 = vld [vmem:[%s297 + $0x88] sm:$0xf]
    %v333 = vld [vmem:[%s297 + $0x8c] sm:$0xf]
    %v334 = vld [vmem:[%s297 + $0x90] sm:$0xf]
    %v335 = vld [vmem:[%s297 + $0x94] sm:$0xf]
    %v336 = vld [vmem:[%s297 + $0x98] sm:$0xf]
    %v337 = vld [vmem:[%s297 + $0x9c] sm:$0xf]
    %v338 = vld [vmem:[%s297 + $0xa0] sm:$0xf]
    %v339 = vld [vmem:[%s297 + $0xa4] sm:$0xf]
    %v340 = vld [vmem:[%s297 + $0xa8] sm:$0xf]
    %v341 = vld [vmem:[%s297 + $0xac] sm:$0xf]
    %v342 = vld [vmem:[%s297 + $0xb0] sm:$0xf]
    %v343 = vld [vmem:[%s297 + $0xb4] sm:$0xf]
    %v344 = vld [vmem:[%s297 + $0xb8] sm:$0xf]
    %v345 = vld [vmem:[%s297 + $0xbc] sm:$0xf]
    %v346 = vld [vmem:[%s297 + $0xc0] sm:$0xf]
    %v347 = vld [vmem:[%s297 + $0xc4] sm:$0xf]
    %v348 = vld [vmem:[%s297 + $0xc8] sm:$0xf]
    %v349 = vld [vmem:[%s297 + $0xcc] sm:$0xf]
    %v350 = vld [vmem:[%s297 + $0xd0] sm:$0xf]
    %v351 = vld [vmem:[%s297 + $0xd4] sm:$0xf]
    %v352 = vld [vmem:[%s297 + $0xd8] sm:$0xf]
    %v353 = vld [vmem:[%s297 + $0xdc] sm:$0xf]
    %v354 = vld [vmem:[%s297 + $0xe0] sm:$0xf]
    %v355 = vld [vmem:[%s297 + $0xe4] sm:$0xf]
    %v356 = vld [vmem:[%s297 + $0xe8] sm:$0xf]
    %v357 = vld [vmem:[%s297 + $0xec] sm:$0xf]
    %v358 = vld [vmem:[%s297 + $0xf0] sm:$0xf]
    %v359 = vld [vmem:[%s297 + $0xf4] sm:$0xf]
    %v360 = vld [vmem:[%s297 + $0xf8] sm:$0xf]
    %v361 = vld [vmem:[%s297 + $0xfc] sm:$0xf]
    %v362 = vld [vmem:[%s297 + $0x100] sm:$0xf]
    %v363 = vld [vmem:[%s297 + $0x104] sm:$0xf]
    %v364 = vld [vmem:[%s297 + $0x108] sm:$0xf]
    %v365 = vld [vmem:[%s297 + $0x10c] sm:$0xf]
    %v366 = vld [vmem:[%s297 + $0x110] sm:$0xf]
    %v367 = vld [vmem:[%s297 + $0x114] sm:$0xf]
    %v368 = vld [vmem:[%s297 + $0x118] sm:$0xf]
    %v369 = vld [vmem:[%s297 + $0x11c] sm:$0xf]
    %v370 = vld [vmem:[%s297 + $0x120] sm:$0xf]
    %v371 = vld [vmem:[%s297 + $0x124] sm:$0xf]
    %v372 = vld [vmem:[%s297 + $0x128] sm:$0xf]
    %v373 = vld [vmem:[%s297 + $0x12c] sm:$0xf]
    %v374 = vld [vmem:[%s297 + $0x130] sm:$0xf]
    %v375 = vld [vmem:[%s297 + $0x134] sm:$0xf]
    %v376 = vld [vmem:[%s297 + $0x138] sm:$0xf]
    %v377 = vld [vmem:[%s297 + $0x13c] sm:$0xf]
    %v378 = vld [vmem:[%s297 + $0x140] sm:$0xf]
    %v379 = vld [vmem:[%s297 + $0x144] sm:$0xf]
    %v380 = vld [vmem:[%s297 + $0x148] sm:$0xf]
    %v381 = vld [vmem:[%s297 + $0x14c] sm:$0xf]
    %v382 = vld [vmem:[%s297 + $0x150] sm:$0xf]
    %v383 = vld [vmem:[%s297 + $0x154] sm:$0xf]
    %v384 = vld [vmem:[%s297 + $0x158] sm:$0xf]
    %v385 = vld [vmem:[%s297 + $0x15c] sm:$0xf]
    %v386 = vld [vmem:[%s297 + $0x160] sm:$0xf]
    %v387 = vld [vmem:[%s297 + $0x164] sm:$0xf]
    %v388 = vld [vmem:[%s297 + $0x168] sm:$0xf]
    %v389 = vld [vmem:[%s297 + $0x16c] sm:$0xf]
    %v390 = vld [vmem:[%s297 + $0x170] sm:$0xf]
    %v391 = vld [vmem:[%s297 + $0x174] sm:$0xf]
    %v392 = vld [vmem:[%s297 + $0x178] sm:$0xf]
    %v393 = vld [vmem:[%s297 + $0x17c] sm:$0xf]
    %v394 = vld [vmem:[%s297 + $0x180] sm:$0xf]
    %v395 = vld [vmem:[%s297 + $0x184] sm:$0xf]
    %v396 = vld [vmem:[%s297 + $0x188] sm:$0xf]
    %v397 = vld [vmem:[%s297 + $0x18c] sm:$0xf]
    %v398 = vld [vmem:[%s297 + $0x190] sm:$0xf]
    %v399 = vld [vmem:[%s297 + $0x194] sm:$0xf]
    %v400 = vld [vmem:[%s297 + $0x198] sm:$0xf]
    %v401 = vld [vmem:[%s297 + $0x19c] sm:$0xf]
    %v402 = vld [vmem:[%s297 + $0x1a0] sm:$0xf]
    %v403 = vld [vmem:[%s297 + $0x1a4] sm:$0xf]
    %v404 = vld [vmem:[%s297 + $0x1a8] sm:$0xf]
    %v405 = vld [vmem:[%s297 + $0x1ac] sm:$0xf]
    %v406 = vld [vmem:[%s297 + $0x1b0] sm:$0xf]
    %v407 = vld [vmem:[%s297 + $0x1b4] sm:$0xf]
    %v408 = vld [vmem:[%s297 + $0x1b8] sm:$0xf]
    %v409 = vld [vmem:[%s297 + $0x1bc] sm:$0xf]
    %v410 = vld [vmem:[%s297 + $0x1c0] sm:$0xf]
    %v411 = vld [vmem:[%s297 + $0x1c4] sm:$0xf]
    %v412 = vld [vmem:[%s297 + $0x1c8] sm:$0xf]
    %v413 = vld [vmem:[%s297 + $0x1cc] sm:$0xf]
    %v414 = vld [vmem:[%s297 + $0x1d0] sm:$0xf]
    %v415 = vld [vmem:[%s297 + $0x1d4] sm:$0xf]
    %v416 = vld [vmem:[%s297 + $0x1d8] sm:$0xf]
    %v417 = vld [vmem:[%s297 + $0x1dc] sm:$0xf]
    %v418 = vld [vmem:[%s297 + $0x1e0] sm:$0xf]
    %v419 = vld [vmem:[%s297 + $0x1e4] sm:$0xf]
    %v420 = vld [vmem:[%s297 + $0x1e8] sm:$0xf]
    %v421 = vld [vmem:[%s297 + $0x1ec] sm:$0xf]
    %v422 = vld [vmem:[%s297 + $0x1f0] sm:$0xf]
    %v423 = vld [vmem:[%s297 + $0x1f4] sm:$0xf]
    %v424 = vld [vmem:[%s297 + $0x1f8] sm:$0xf]
    %v425 = vld [vmem:[%s297 + $0x1fc] sm:$0xf]
    %v426 = vld [vmem:[#allocation2] sm:$0xf]
    %v427 = vld [vmem:[#allocation2 + $0x4] sm:$0xf]
    %v428 = vld [vmem:[#allocation9] sm:$0xff]
    %v430 = vlaneseq
    %v431 = vshrl.u32 %v430, 7
    %v432 = vsub.s32 0, %v431
    %v433 = vrot.slane %v428, %v432
    %v434 = vlaneseq
    %v435 = vshrl.u32 %v434, 7
    %v436 = vsub.s32 1, %v435
    %v437 = vrot.slane %v428, %v436
    %v438 = vlaneseq
    %v439 = vshrl.u32 %v438, 7
    %v440 = vsub.s32 2, %v439
    %v441 = vrot.slane %v428, %v440
    %v442 = vlaneseq
    %v443 = vshrl.u32 %v442, 7
    %v444 = vsub.s32 3, %v443
    %v445 = vrot.slane %v428, %v444
    %v446 = vlaneseq
    %v447 = vshrl.u32 %v446, 7
    %v448 = vsub.s32 4, %v447
    %v449 = vrot.slane %v428, %v448
    %v450 = vlaneseq
    %v451 = vshrl.u32 %v450, 7
    %v452 = vsub.s32 5, %v451
    %v453 = vrot.slane %v428, %v452
    %v454 = vlaneseq
    %v455 = vshrl.u32 %v454, 7
    %v456 = vsub.s32 6, %v455
    %v457 = vrot.slane %v428, %v456
    %v458 = vlaneseq
    %v459 = vshrl.u32 %v458, 7
    %v460 = vsub.s32 7, %v459
    %v461 = vrot.slane %v428, %v460
    %v472 = vunpack.c.l.b16 %v426
    %v473 = vunpack.c.l.b16 %v427
    %v474 = vpack.c.b16 %v473, %v472
    %v604 = vunpack.c.l.b16 %v168
    %v605 = vunpack.c.l.b16 %v169
    %v606 = vunpack.c.l.b16 %v170
    %v607 = vunpack.c.l.b16 %v171
    %v608 = vunpack.c.l.b16 %v172
    %v609 = vunpack.c.l.b16 %v173
    %v610 = vunpack.c.l.b16 %v174
    %v611 = vunpack.c.l.b16 %v175
    %v612 = vunpack.c.l.b16 %v176
    %v613 = vunpack.c.l.b16 %v177
    %v614 = vunpack.c.l.b16 %v178
    %v615 = vunpack.c.l.b16 %v179
    %v616 = vunpack.c.l.b16 %v180
    %v617 = vunpack.c.l.b16 %v181
    %v618 = vunpack.c.l.b16 %v182
    %v619 = vunpack.c.l.b16 %v183
    %v620 = vunpack.c.l.b16 %v184
    %v621 = vunpack.c.l.b16 %v185
    %v622 = vunpack.c.l.b16 %v186
    %v623 = vunpack.c.l.b16 %v187
    %v624 = vunpack.c.l.b16 %v188
    %v625 = vunpack.c.l.b16 %v189
    %v626 = vunpack.c.l.b16 %v190
    %v627 = vunpack.c.l.b16 %v191
    %v628 = vunpack.c.l.b16 %v192
    %v629 = vunpack.c.l.b16 %v193
    %v630 = vunpack.c.l.b16 %v194
    %v631 = vunpack.c.l.b16 %v195
    %v632 = vunpack.c.l.b16 %v196
    %v633 = vunpack.c.l.b16 %v197
    %v634 = vunpack.c.l.b16 %v198
    %v635 = vunpack.c.l.b16 %v199
    %v636 = vunpack.c.l.b16 %v200
    %v637 = vunpack.c.l.b16 %v201
    %v638 = vunpack.c.l.b16 %v202
    %v639 = vunpack.c.l.b16 %v203
    %v640 = vunpack.c.l.b16 %v204
    %v641 = vunpack.c.l.b16 %v205
    %v642 = vunpack.c.l.b16 %v206
    %v643 = vunpack.c.l.b16 %v207
    %v644 = vunpack.c.l.b16 %v208
    %v645 = vunpack.c.l.b16 %v209
    %v646 = vunpack.c.l.b16 %v210
    %v647 = vunpack.c.l.b16 %v211
    %v648 = vunpack.c.l.b16 %v212
    %v649 = vunpack.c.l.b16 %v213
    %v650 = vunpack.c.l.b16 %v214
    %v651 = vunpack.c.l.b16 %v215
    %v652 = vunpack.c.l.b16 %v216
    %v653 = vunpack.c.l.b16 %v217
    %v654 = vunpack.c.l.b16 %v218
    %v655 = vunpack.c.l.b16 %v219
    %v656 = vunpack.c.l.b16 %v220
    %v657 = vunpack.c.l.b16 %v221
    %v658 = vunpack.c.l.b16 %v222
    %v659 = vunpack.c.l.b16 %v223
    %v660 = vunpack.c.l.b16 %v224
    %v661 = vunpack.c.l.b16 %v225
    %v662 = vunpack.c.l.b16 %v226
    %v663 = vunpack.c.l.b16 %v227
    %v664 = vunpack.c.l.b16 %v228
    %v665 = vunpack.c.l.b16 %v229
    %v666 = vunpack.c.l.b16 %v230
    %v667 = vunpack.c.l.b16 %v231
    %v668 = vunpack.c.l.b16 %v232
    %v669 = vunpack.c.l.b16 %v233
    %v670 = vunpack.c.l.b16 %v234
    %v671 = vunpack.c.l.b16 %v235
    %v672 = vunpack.c.l.b16 %v236
    %v673 = vunpack.c.l.b16 %v237
    %v674 = vunpack.c.l.b16 %v238
    %v675 = vunpack.c.l.b16 %v239
    %v676 = vunpack.c.l.b16 %v240
    %v677 = vunpack.c.l.b16 %v241
    %v678 = vunpack.c.l.b16 %v242
    %v679 = vunpack.c.l.b16 %v243
    %v680 = vunpack.c.l.b16 %v244
    %v681 = vunpack.c.l.b16 %v245
    %v682 = vunpack.c.l.b16 %v246
    %v683 = vunpack.c.l.b16 %v247
    %v684 = vunpack.c.l.b16 %v248
    %v685 = vunpack.c.l.b16 %v249
    %v686 = vunpack.c.l.b16 %v250
    %v687 = vunpack.c.l.b16 %v251
    %v688 = vunpack.c.l.b16 %v252
    %v689 = vunpack.c.l.b16 %v253
    %v690 = vunpack.c.l.b16 %v254
    %v691 = vunpack.c.l.b16 %v255
    %v692 = vunpack.c.l.b16 %v256
    %v693 = vunpack.c.l.b16 %v257
    %v694 = vunpack.c.l.b16 %v258
    %v695 = vunpack.c.l.b16 %v259
    %v696 = vunpack.c.l.b16 %v260
    %v697 = vunpack.c.l.b16 %v261
    %v698 = vunpack.c.l.b16 %v262
    %v699 = vunpack.c.l.b16 %v263
    %v700 = vunpack.c.l.b16 %v264
    %v701 = vunpack.c.l.b16 %v265
    %v702 = vunpack.c.l.b16 %v266
    %v703 = vunpack.c.l.b16 %v267
    %v704 = vunpack.c.l.b16 %v268
    %v705 = vunpack.c.l.b16 %v269
    %v706 = vunpack.c.l.b16 %v270
    %v707 = vunpack.c.l.b16 %v271
    %v708 = vunpack.c.l.b16 %v272
    %v709 = vunpack.c.l.b16 %v273
    %v710 = vunpack.c.l.b16 %v274
    %v711 = vunpack.c.l.b16 %v275
    %v712 = vunpack.c.l.b16 %v276
    %v713 = vunpack.c.l.b16 %v277
    %v714 = vunpack.c.l.b16 %v278
    %v715 = vunpack.c.l.b16 %v279
    %v716 = vunpack.c.l.b16 %v280
    %v717 = vunpack.c.l.b16 %v281
    %v718 = vunpack.c.l.b16 %v282
    %v719 = vunpack.c.l.b16 %v283
    %v720 = vunpack.c.l.b16 %v284
    %v721 = vunpack.c.l.b16 %v285
    %v722 = vunpack.c.l.b16 %v286
    %v723 = vunpack.c.l.b16 %v287
    %v724 = vunpack.c.l.b16 %v288
    %v725 = vunpack.c.l.b16 %v289
    %v726 = vunpack.c.l.b16 %v290
    %v727 = vunpack.c.l.b16 %v291
    %v728 = vunpack.c.l.b16 %v292
    %v729 = vunpack.c.l.b16 %v293
    %v730 = vunpack.c.l.b16 %v294
    %v731 = vunpack.c.l.b16 %v295
    %v732 = vpack.c.b16 %v605, %v604
    %v733 = vpack.c.b16 %v607, %v606
    %v734 = vpack.c.b16 %v609, %v608
    %v735 = vpack.c.b16 %v611, %v610
    %v736 = vpack.c.b16 %v613, %v612
    %v737 = vpack.c.b16 %v615, %v614
    %v738 = vpack.c.b16 %v617, %v616
    %v739 = vpack.c.b16 %v619, %v618
    %v740 = vpack.c.b16 %v621, %v620
    %v741 = vpack.c.b16 %v623, %v622
    %v742 = vpack.c.b16 %v625, %v624
    %v743 = vpack.c.b16 %v627, %v626
    %v744 = vpack.c.b16 %v629, %v628
    %v745 = vpack.c.b16 %v631, %v630
    %v746 = vpack.c.b16 %v633, %v632
    %v747 = vpack.c.b16 %v635, %v634
    %v748 = vpack.c.b16 %v637, %v636
    %v749 = vpack.c.b16 %v639, %v638
    %v750 = vpack.c.b16 %v641, %v640
    %v751 = vpack.c.b16 %v643, %v642
    %v752 = vpack.c.b16 %v645, %v644
    %v753 = vpack.c.b16 %v647, %v646
    %v754 = vpack.c.b16 %v649, %v648
    %v755 = vpack.c.b16 %v651, %v650
    %v756 = vpack.c.b16 %v653, %v652
    %v757 = vpack.c.b16 %v655, %v654
    %v758 = vpack.c.b16 %v657, %v656
    %v759 = vpack.c.b16 %v659, %v658
    %v760 = vpack.c.b16 %v661, %v660
    %v761 = vpack.c.b16 %v663, %v662
    %v762 = vpack.c.b16 %v665, %v664
    %v763 = vpack.c.b16 %v667, %v666
    %v764 = vpack.c.b16 %v669, %v668
    %v765 = vpack.c.b16 %v671, %v670
    %v766 = vpack.c.b16 %v673, %v672
    %v767 = vpack.c.b16 %v675, %v674
    %v768 = vpack.c.b16 %v677, %v676
    %v769 = vpack.c.b16 %v679, %v678
    %v770 = vpack.c.b16 %v681, %v680
    %v771 = vpack.c.b16 %v683, %v682
    %v772 = vpack.c.b16 %v685, %v684
    %v773 = vpack.c.b16 %v687, %v686
    %v774 = vpack.c.b16 %v689, %v688
    %v775 = vpack.c.b16 %v691, %v690
    %v776 = vpack.c.b16 %v693, %v692
    %v777 = vpack.c.b16 %v695, %v694
    %v778 = vpack.c.b16 %v697, %v696
    %v779 = vpack.c.b16 %v699, %v698
    %v780 = vpack.c.b16 %v701, %v700
    %v781 = vpack.c.b16 %v703, %v702
    %v782 = vpack.c.b16 %v705, %v704
    %v783 = vpack.c.b16 %v707, %v706
    %v784 = vpack.c.b16 %v709, %v708
    %v785 = vpack.c.b16 %v711, %v710
    %v786 = vpack.c.b16 %v713, %v712
    %v787 = vpack.c.b16 %v715, %v714
    %v788 = vpack.c.b16 %v717, %v716
    %v789 = vpack.c.b16 %v719, %v718
    %v790 = vpack.c.b16 %v721, %v720
    %v791 = vpack.c.b16 %v723, %v722
    %v792 = vpack.c.b16 %v725, %v724
    %v793 = vpack.c.b16 %v727, %v726
    %v794 = vpack.c.b16 %v729, %v728
    %v795 = vpack.c.b16 %v731, %v730
    %860 = vmatprep.subr.bf16.mxu0 0
    %861 = vmatpush1.bf16.xpose.msra.mxu0 %v739
    %862 = vmatprep.subr.bf16.mxu0 0
    %863 = vmatpush1.bf16.xpose.msra.mxu0 %v738
    %864 = vmatprep.subr.bf16.mxu0 0
    %865 = vmatpush1.bf16.xpose.msra.mxu0 %v737
    %866 = vmatprep.subr.bf16.mxu0 0
    %867 = vmatpush1.bf16.xpose.msra.mxu0 %v736
    %868 = vmatprep.subr.bf16.mxu0 0
    %869 = vmatpush1.bf16.xpose.msra.mxu0 %v735
    %870 = vmatprep.subr.bf16.mxu0 0
    %871 = vmatpush1.bf16.xpose.msra.mxu0 %v734
    %872 = vmatprep.subr.bf16.mxu0 0
    %873 = vmatpush1.bf16.xpose.msra.mxu0 %v733
    %874 = vmatprep.subr.bf16.mxu0 0
    %875 = vmatpush1.bf16.xpose.msra.mxu0 %v732
    %876 = vmatprep.subr.bf16.mxu0 0
    %877 = vmatpush2.bf16.xpose.msra.mxu0 %v747
    %878 = vmatprep.subr.bf16.mxu0 0
    %879 = vmatpush2.bf16.xpose.msra.mxu0 %v746
    %880 = vmatprep.subr.bf16.mxu0 0
    %881 = vmatpush2.bf16.xpose.msra.mxu0 %v745
    %882 = vmatprep.subr.bf16.mxu0 0
    %883 = vmatpush2.bf16.xpose.msra.mxu0 %v744
    %884 = vmatprep.subr.bf16.mxu0 0
    %885 = vmatpush2.bf16.xpose.msra.mxu0 %v743
    %886 = vmatprep.subr.bf16.mxu0 0
    %887 = vmatpush2.bf16.xpose.msra.mxu0 %v742
    %888 = vmatprep.subr.bf16.mxu0 0
    %889 = vmatpush2.bf16.xpose.msra.mxu0 %v741
    %890 = vmatprep.subr.bf16.mxu0 0
    %891 = vmatpush2.bf16.xpose.msra.mxu0 %v740
    %892 = vmatprep.mubr.bf16.mxu0 0
    %893 = vmatmul.mubr.bf16.gmra.mxu0 %v474
    %v894 = vpop.f32.mrf.mxu0
    %v895 = vadd.f32 %v433, %v894
    %v896 = vpop.f32.mrf.mxu0
    %v897 = vadd.f32 %v437, %v896
    %v898 = vpop.f32.mrf.mxu0
    %v899 = vadd.f32 %v433, %v898
    %v900 = vpop.f32.mrf.mxu0
    %v901 = vadd.f32 %v437, %v900
    %902 = vdwg.mxu0
    %903 = vmatprep.subr.bf16.mxu0 0
    %904 = vmatpush1.bf16.xpose.msra.mxu0 %v755
    %905 = vmatprep.subr.bf16.mxu0 0
    %906 = vmatpush1.bf16.xpose.msra.mxu0 %v754
    %907 = vmatprep.subr.bf16.mxu0 0
    %908 = vmatpush1.bf16.xpose.msra.mxu0 %v753
    %909 = vmatprep.subr.bf16.mxu0 0
    %910 = vmatpush1.bf16.xpose.msra.mxu0 %v752
    %911 = vmatprep.subr.bf16.mxu0 0
    %912 = vmatpush1.bf16.xpose.msra.mxu0 %v751
    %913 = vmatprep.subr.bf16.mxu0 0
    %914 = vmatpush1.bf16.xpose.msra.mxu0 %v750
    %915 = vmatprep.subr.bf16.mxu0 0
    %916 = vmatpush1.bf16.xpose.msra.mxu0 %v749
    %917 = vmatprep.subr.bf16.mxu0 0
    %918 = vmatpush1.bf16.xpose.msra.mxu0 %v748
    %919 = vmatprep.subr.bf16.mxu0 0
    %920 = vmatpush2.bf16.xpose.msra.mxu0 %v763
    %921 = vmatprep.subr.bf16.mxu0 0
    %922 = vmatpush2.bf16.xpose.msra.mxu0 %v762
    %923 = vmatprep.subr.bf16.mxu0 0
    %924 = vmatpush2.bf16.xpose.msra.mxu0 %v761
    %925 = vmatprep.subr.bf16.mxu0 0
    %926 = vmatpush2.bf16.xpose.msra.mxu0 %v760
    %927 = vmatprep.subr.bf16.mxu0 0
    %928 = vmatpush2.bf16.xpose.msra.mxu0 %v759
    %929 = vmatprep.subr.bf16.mxu0 0
    %930 = vmatpush2.bf16.xpose.msra.mxu0 %v758
    %931 = vmatprep.subr.bf16.mxu0 0
    %932 = vmatpush2.bf16.xpose.msra.mxu0 %v757
    %933 = vmatprep.subr.bf16.mxu0 0
    %934 = vmatpush2.bf16.xpose.msra.mxu0 %v756
    %935 = vmatprep.mubr.bf16.mxu0 0
    %936 = vmatmul.mubr.bf16.gmra.mxu0 %v474
    %v937 = vpop.f32.mrf.mxu0
    %v938 = vadd.f32 %v441, %v937
    %v939 = vpop.f32.mrf.mxu0
    %v940 = vadd.f32 %v445, %v939
    %v941 = vpop.f32.mrf.mxu0
    %v942 = vadd.f32 %v441, %v941
    %v943 = vpop.f32.mrf.mxu0
    %v944 = vadd.f32 %v445, %v943
    %945 = vdwg.mxu0
    %946 = vmatprep.subr.bf16.mxu0 0
    %947 = vmatpush1.bf16.xpose.msra.mxu0 %v771
    %948 = vmatprep.subr.bf16.mxu0 0
    %949 = vmatpush1.bf16.xpose.msra.mxu0 %v770
    %950 = vmatprep.subr.bf16.mxu0 0
    %951 = vmatpush1.bf16.xpose.msra.mxu0 %v769
    %952 = vmatprep.subr.bf16.mxu0 0
    %953 = vmatpush1.bf16.xpose.msra.mxu0 %v768
    %954 = vmatprep.subr.bf16.mxu0 0
    %955 = vmatpush1.bf16.xpose.msra.mxu0 %v767
    %956 = vmatprep.subr.bf16.mxu0 0
    %957 = vmatpush1.bf16.xpose.msra.mxu0 %v766
    %958 = vmatprep.subr.bf16.mxu0 0
    %959 = vmatpush1.bf16.xpose.msra.mxu0 %v765
    %960 = vmatprep.subr.bf16.mxu0 0
    %961 = vmatpush1.bf16.xpose.msra.mxu0 %v764
    %962 = vmatprep.subr.bf16.mxu0 0
    %963 = vmatpush2.bf16.xpose.msra.mxu0 %v779
    %964 = vmatprep.subr.bf16.mxu0 0
    %965 = vmatpush2.bf16.xpose.msra.mxu0 %v778
    %966 = vmatprep.subr.bf16.mxu0 0
    %967 = vmatpush2.bf16.xpose.msra.mxu0 %v777
    %968 = vmatprep.subr.bf16.mxu0 0
    %969 = vmatpush2.bf16.xpose.msra.mxu0 %v776
    %970 = vmatprep.subr.bf16.mxu0 0
    %971 = vmatpush2.bf16.xpose.msra.mxu0 %v775
    %972 = vmatprep.subr.bf16.mxu0 0
    %973 = vmatpush2.bf16.xpose.msra.mxu0 %v774
    %974 = vmatprep.subr.bf16.mxu0 0
    %975 = vmatpush2.bf16.xpose.msra.mxu0 %v773
    %976 = vmatprep.subr.bf16.mxu0 0
    %977 = vmatpush2.bf16.xpose.msra.mxu0 %v772
    %978 = vmatprep.mubr.bf16.mxu0 0
    %979 = vmatmul.mubr.bf16.gmra.mxu0 %v474
    %v980 = vpop.f32.mrf.mxu0
    %v981 = vadd.f32 %v449, %v980
    %v982 = vpop.f32.mrf.mxu0
    %v983 = vadd.f32 %v453, %v982
    %v984 = vpop.f32.mrf.mxu0
    %v985 = vadd.f32 %v449, %v984
    %v986 = vpop.f32.mrf.mxu0
    %v987 = vadd.f32 %v453, %v986
    %988 = vdwg.mxu0
    %989 = vmatprep.subr.bf16.mxu0 0
    %990 = vmatpush1.bf16.xpose.msra.mxu0 %v787
    %991 = vmatprep.subr.bf16.mxu0 0
    %992 = vmatpush1.bf16.xpose.msra.mxu0 %v786
    %993 = vmatprep.subr.bf16.mxu0 0
    %994 = vmatpush1.bf16.xpose.msra.mxu0 %v785
    %995 = vmatprep.subr.bf16.mxu0 0
    %996 = vmatpush1.bf16.xpose.msra.mxu0 %v784
    %997 = vmatprep.subr.bf16.mxu0 0
    %998 = vmatpush1.bf16.xpose.msra.mxu0 %v783
    %999 = vmatprep.subr.bf16.mxu0 0
    %1000 = vmatpush1.bf16.xpose.msra.mxu0 %v782
    %1001 = vmatprep.subr.bf16.mxu0 0
    %1002 = vmatpush1.bf16.xpose.msra.mxu0 %v781
    %1003 = vmatprep.subr.bf16.mxu0 0
    %1004 = vmatpush1.bf16.xpose.msra.mxu0 %v780
    %1005 = vmatprep.subr.bf16.mxu0 0
    %1006 = vmatpush2.bf16.xpose.msra.mxu0 %v795
    %1007 = vmatprep.subr.bf16.mxu0 0
    %1008 = vmatpush2.bf16.xpose.msra.mxu0 %v794
    %1009 = vmatprep.subr.bf16.mxu0 0
    %1010 = vmatpush2.bf16.xpose.msra.mxu0 %v793
    %1011 = vmatprep.subr.bf16.mxu0 0
    %1012 = vmatpush2.bf16.xpose.msra.mxu0 %v792
    %1013 = vmatprep.subr.bf16.mxu0 0
    %1014 = vmatpush2.bf16.xpose.msra.mxu0 %v791
    %1015 = vmatprep.subr.bf16.mxu0 0
    %1016 = vmatpush2.bf16.xpose.msra.mxu0 %v790
    %1017 = vmatprep.subr.bf16.mxu0 0
    %1018 = vmatpush2.bf16.xpose.msra.mxu0 %v789
    %1019 = vmatprep.subr.bf16.mxu0 0
    %1020 = vmatpush2.bf16.xpose.msra.mxu0 %v788
    %1021 = vmatprep.mubr.bf16.mxu0 0
    %1022 = vmatmul.mubr.bf16.gmra.mxu0 %v474
    %v1023 = vpop.f32.mrf.mxu0
    %v1024 = vadd.f32 %v457, %v1023
    %v1025 = vpop.f32.mrf.mxu0
    %v1026 = vadd.f32 %v461, %v1025
    %v1027 = vpop.f32.mrf.mxu0
    %v1028 = vadd.f32 %v457, %v1027
    %v1029 = vpop.f32.mrf.mxu0
    %v1030 = vadd.f32 %v461, %v1029
    %1031 = vdwg.mxu0
    %vm1032 = vcmp.ne.f32.partialorder %v895, %v895
    %vm1033 = vcmp.ne.f32.partialorder %v897, %v897
    %vm1034 = vcmp.ne.f32.partialorder %v938, %v938
    %vm1035 = vcmp.ne.f32.partialorder %v940, %v940
    %vm1036 = vcmp.ne.f32.partialorder %v981, %v981
    %vm1037 = vcmp.ne.f32.partialorder %v983, %v983
    %vm1038 = vcmp.ne.f32.partialorder %v1024, %v1024
    %vm1039 = vcmp.ne.f32.partialorder %v1026, %v1026
    %vm1040 = vcmp.ne.f32.partialorder %v899, %v899
    %vm1041 = vcmp.ne.f32.partialorder %v901, %v901
    %vm1042 = vcmp.ne.f32.partialorder %v942, %v942
    %vm1043 = vcmp.ne.f32.partialorder %v944, %v944
    %vm1044 = vcmp.ne.f32.partialorder %v985, %v985
    %vm1045 = vcmp.ne.f32.partialorder %v987, %v987
    %vm1046 = vcmp.ne.f32.partialorder %v1028, %v1028
    %vm1047 = vcmp.ne.f32.partialorder %v1030, %v1030
    %v1048 = vsel %vm1032, 0.0, %v895
    %v1049 = vsel %vm1033, 0.0, %v897
    %v1050 = vsel %vm1034, 0.0, %v938
    %v1051 = vsel %vm1035, 0.0, %v940
    %v1052 = vsel %vm1036, 0.0, %v981
    %v1053 = vsel %vm1037, 0.0, %v983
    %v1054 = vsel %vm1038, 0.0, %v1024
    %v1055 = vsel %vm1039, 0.0, %v1026
    %v1056 = vsel %vm1040, 0.0, %v899
    %v1057 = vsel %vm1041, 0.0, %v901
    %v1058 = vsel %vm1042, 0.0, %v942
    %v1059 = vsel %vm1043, 0.0, %v944
    %v1060 = vsel %vm1044, 0.0, %v985
    %v1061 = vsel %vm1045, 0.0, %v987
    %v1062 = vsel %vm1046, 0.0, %v1028
    %v1063 = vsel %vm1047, 0.0, %v1030
    %v1064 = vand.u32 2147483647, %v1048
    %v1065 = vand.u32 2147483647, %v1049
    %v1066 = vand.u32 2147483647, %v1050
    %v1067 = vand.u32 2147483647, %v1051
    %v1068 = vand.u32 2147483647, %v1052
    %v1069 = vand.u32 2147483647, %v1053
    %v1070 = vand.u32 2147483647, %v1054
    %v1071 = vand.u32 2147483647, %v1055
    %v1072 = vand.u32 2147483647, %v1056
    %v1073 = vand.u32 2147483647, %v1057
    %v1074 = vand.u32 2147483647, %v1058
    %v1075 = vand.u32 2147483647, %v1059
    %v1076 = vand.u32 2147483647, %v1060
    %v1077 = vand.u32 2147483647, %v1061
    %v1078 = vand.u32 2147483647, %v1062
    %v1079 = vand.u32 2147483647, %v1063
    %vm1080 = vcmp.eq.f32.partialorder %v1064, inf
    %vm1081 = vcmp.eq.f32.partialorder %v1065, inf
    %vm1082 = vcmp.eq.f32.partialorder %v1066, inf
    %vm1083 = vcmp.eq.f32.partialorder %v1067, inf
    %vm1084 = vcmp.eq.f32.partialorder %v1068, inf
    %vm1085 = vcmp.eq.f32.partialorder %v1069, inf
    %vm1086 = vcmp.eq.f32.partialorder %v1070, inf
    %vm1087 = vcmp.eq.f32.partialorder %v1071, inf
    %vm1088 = vcmp.eq.f32.partialorder %v1072, inf
    %vm1089 = vcmp.eq.f32.partialorder %v1073, inf
    %vm1090 = vcmp.eq.f32.partialorder %v1074, inf
    %vm1091 = vcmp.eq.f32.partialorder %v1075, inf
    %vm1092 = vcmp.eq.f32.partialorder %v1076, inf
    %vm1093 = vcmp.eq.f32.partialorder %v1077, inf
    %vm1094 = vcmp.eq.f32.partialorder %v1078, inf
    %vm1095 = vcmp.eq.f32.partialorder %v1079, inf
    %vm1096 = vcmp.gt.f32.partialorder %v1048, 0.0
    %vm1097 = vcmp.gt.f32.partialorder %v1049, 0.0
    %vm1098 = vcmp.gt.f32.partialorder %v1050, 0.0
    %vm1099 = vcmp.gt.f32.partialorder %v1051, 0.0
    %vm1100 = vcmp.gt.f32.partialorder %v1052, 0.0
    %vm1101 = vcmp.gt.f32.partialorder %v1053, 0.0
    %vm1102 = vcmp.gt.f32.partialorder %v1054, 0.0
    %vm1103 = vcmp.gt.f32.partialorder %v1055, 0.0
    %vm1104 = vcmp.gt.f32.partialorder %v1056, 0.0
    %vm1105 = vcmp.gt.f32.partialorder %v1057, 0.0
    %vm1106 = vcmp.gt.f32.partialorder %v1058, 0.0
    %vm1107 = vcmp.gt.f32.partialorder %v1059, 0.0
    %vm1108 = vcmp.gt.f32.partialorder %v1060, 0.0
    %vm1109 = vcmp.gt.f32.partialorder %v1061, 0.0
    %vm1110 = vcmp.gt.f32.partialorder %v1062, 0.0
    %vm1111 = vcmp.gt.f32.partialorder %v1063, 0.0
    %v1112 = vsel %vm1096, 5.0, -5.0
    %v1113 = vsel %vm1097, 5.0, -5.0
    %v1114 = vsel %vm1098, 5.0, -5.0
    %v1115 = vsel %vm1099, 5.0, -5.0
    %v1116 = vsel %vm1100, 5.0, -5.0
    %v1117 = vsel %vm1101, 5.0, -5.0
    %v1118 = vsel %vm1102, 5.0, -5.0
    %v1119 = vsel %vm1103, 5.0, -5.0
    %v1120 = vsel %vm1104, 5.0, -5.0
    %v1121 = vsel %vm1105, 5.0, -5.0
    %v1122 = vsel %vm1106, 5.0, -5.0
    %v1123 = vsel %vm1107, 5.0, -5.0
    %v1124 = vsel %vm1108, 5.0, -5.0
    %v1125 = vsel %vm1109, 5.0, -5.0
    %v1126 = vsel %vm1110, 5.0, -5.0
    %v1127 = vsel %vm1111, 5.0, -5.0
    %v1128 = vsel %vm1080, %v1112, %v1048
    %v1129 = vsel %vm1081, %v1113, %v1049
    %v1130 = vsel %vm1082, %v1114, %v1050
    %v1131 = vsel %vm1083, %v1115, %v1051
    %v1132 = vsel %vm1084, %v1116, %v1052
    %v1133 = vsel %vm1085, %v1117, %v1053
    %v1134 = vsel %vm1086, %v1118, %v1054
    %v1135 = vsel %vm1087, %v1119, %v1055
    %v1136 = vsel %vm1088, %v1120, %v1056
    %v1137 = vsel %vm1089, %v1121, %v1057
    %v1138 = vsel %vm1090, %v1122, %v1058
    %v1139 = vsel %vm1091, %v1123, %v1059
    %v1140 = vsel %vm1092, %v1124, %v1060
    %v1141 = vsel %vm1093, %v1125, %v1061
    %v1142 = vsel %vm1094, %v1126, %v1062
    %v1143 = vsel %vm1095, %v1127, %v1063
    %v1144 = vpack.c.bf16 %v1136, %v1128
    %v1145 = vpack.c.bf16 %v1137, %v1129
    %v1146 = vpack.c.bf16 %v1138, %v1130
    %v1147 = vpack.c.bf16 %v1139, %v1131
    %v1148 = vpack.c.bf16 %v1140, %v1132
    %v1149 = vpack.c.bf16 %v1141, %v1133
    %v1150 = vpack.c.bf16 %v1142, %v1134
    %v1151 = vpack.c.bf16 %v1143, %v1135
    %v1152 = vmul.bf16 %v1144, 1056980736
    %v1153 = vmul.bf16 %v1145, 1056980736
    %v1154 = vmul.bf16 %v1146, 1056980736
    %v1155 = vmul.bf16 %v1147, 1056980736
    %v1156 = vmul.bf16 %v1148, 1056980736
    %v1157 = vmul.bf16 %v1149, 1056980736
    %v1158 = vmul.bf16 %v1150, 1056980736
    %v1159 = vmul.bf16 %v1151, 1056980736
    %v1160 = vmul.bf16 %v1144, 1060454197
    %v1161 = vmul.bf16 %v1145, 1060454197
    %v1162 = vmul.bf16 %v1146, 1060454197
    %v1163 = vmul.bf16 %v1147, 1060454197
    %v1164 = vmul.bf16 %v1148, 1060454197
    %v1165 = vmul.bf16 %v1149, 1060454197
    %v1166 = vmul.bf16 %v1150, 1060454197
    %v1167 = vmul.bf16 %v1151, 1060454197
    %v1168 = vand.u32 2147450879, %v1160
    %v1169 = vand.u32 2147450879, %v1161
    %v1170 = vand.u32 2147450879, %v1162
    %v1171 = vand.u32 2147450879, %v1163
    %v1172 = vand.u32 2147450879, %v1164
    %v1173 = vand.u32 2147450879, %v1165
    %v1174 = vand.u32 2147450879, %v1166
    %v1175 = vand.u32 2147450879, %v1167
    %v1176 = vmul.bf16 %v1168, 1051213480
    %v1177 = vmul.bf16 %v1169, 1051213480
    %v1178 = vmul.bf16 %v1170, 1051213480
    %v1179 = vmul.bf16 %v1171, 1051213480
    %v1180 = vmul.bf16 %v1172, 1051213480
    %v1181 = vmul.bf16 %v1173, 1051213480
    %v1182 = vmul.bf16 %v1174, 1051213480
    %v1183 = vmul.bf16 %v1175, 1051213480
    %v1184 = vadd.bf16 %v1176, 1065369472
    %v1185 = vadd.bf16 %v1177, 1065369472
    %v1186 = vadd.bf16 %v1178, 1065369472
    %v1187 = vadd.bf16 %v1179, 1065369472
    %v1188 = vadd.bf16 %v1180, 1065369472
    %v1189 = vadd.bf16 %v1181, 1065369472
    %v1190 = vadd.bf16 %v1182, 1065369472
    %v1191 = vadd.bf16 %v1183, 1065369472
    %v1192 = vrcp.bf16.pop %v1184
    %v1193 = vmul.bf16 1065369472, %v1192
    %v1194 = vrcp.bf16.pop %v1185
    %v1195 = vmul.bf16 1065369472, %v1194
    %v1196 = vrcp.bf16.pop %v1186
    %v1197 = vmul.bf16 1065369472, %v1196
    %v1198 = vrcp.bf16.pop %v1187
    %v1199 = vmul.bf16 1065369472, %v1198
    %v1200 = vrcp.bf16.pop %v1188
    %v1201 = vmul.bf16 1065369472, %v1200
    %v1202 = vrcp.bf16.pop %v1189
    %v1203 = vmul.bf16 1065369472, %v1202
    %v1204 = vrcp.bf16.pop %v1190
    %v1205 = vmul.bf16 1065369472, %v1204
    %v1206 = vrcp.bf16.pop %v1191
    %v1207 = vmul.bf16 1065369472, %v1206
    %v1208 = vmul.bf16 %v1193, 1065893768
    %v1209 = vmul.bf16 %v1195, 1065893768
    %v1210 = vmul.bf16 %v1197, 1065893768
    %v1211 = vmul.bf16 %v1199, 1065893768
    %v1212 = vmul.bf16 %v1201, 1065893768
    %v1213 = vmul.bf16 %v1203, 1065893768
    %v1214 = vmul.bf16 %v1205, 1065893768
    %v1215 = vmul.bf16 %v1207, 1065893768
    %v1216 = vadd.bf16 %v1208, 3216687034
    %v1217 = vadd.bf16 %v1209, 3216687034
    %v1218 = vadd.bf16 %v1210, 3216687034
    %v1219 = vadd.bf16 %v1211, 3216687034
    %v1220 = vadd.bf16 %v1212, 3216687034
    %v1221 = vadd.bf16 %v1213, 3216687034
    %v1222 = vadd.bf16 %v1214, 3216687034
    %v1223 = vadd.bf16 %v1215, 3216687034
    %v1224 = vmul.bf16 %v1216, %v1193
    %v1225 = vmul.bf16 %v1217, %v1195
    %v1226 = vmul.bf16 %v1218, %v1197
    %v1227 = vmul.bf16 %v1219, %v1199
    %v1228 = vmul.bf16 %v1220, %v1201
    %v1229 = vmul.bf16 %v1221, %v1203
    %v1230 = vmul.bf16 %v1222, %v1205
    %v1231 = vmul.bf16 %v1223, %v1207
    %v1232 = vadd.bf16 %v1224, 1068908470
    %v1233 = vadd.bf16 %v1225, 1068908470
    %v1234 = vadd.bf16 %v1226, 1068908470
    %v1235 = vadd.bf16 %v1227, 1068908470
    %v1236 = vadd.bf16 %v1228, 1068908470
    %v1237 = vadd.bf16 %v1229, 1068908470
    %v1238 = vadd.bf16 %v1230, 1068908470
    %v1239 = vadd.bf16 %v1231, 1068908470
    %v1240 = vmul.bf16 %v1232, %v1193
    %v1241 = vmul.bf16 %v1233, %v1195
    %v1242 = vmul.bf16 %v1234, %v1197
    %v1243 = vmul.bf16 %v1235, %v1199
    %v1244 = vmul.bf16 %v1236, %v1201
    %v1245 = vmul.bf16 %v1237, %v1203
    %v1246 = vmul.bf16 %v1238, %v1205
    %v1247 = vmul.bf16 %v1239, %v1207
    %v1248 = vadd.bf16 %v1240, 3197288082
    %v1249 = vadd.bf16 %v1241, 3197288082
    %v1250 = vadd.bf16 %v1242, 3197288082
    %v1251 = vadd.bf16 %v1243, 3197288082
    %v1252 = vadd.bf16 %v1244, 3197288082
    %v1253 = vadd.bf16 %v1245, 3197288082
    %v1254 = vadd.bf16 %v1246, 3197288082
    %v1255 = vadd.bf16 %v1247, 3197288082
    %v1256 = vmul.bf16 %v1248, %v1193
    %v1257 = vmul.bf16 %v1249, %v1195
    %v1258 = vmul.bf16 %v1250, %v1197
    %v1259 = vmul.bf16 %v1251, %v1199
    %v1260 = vmul.bf16 %v1252, %v1201
    %v1261 = vmul.bf16 %v1253, %v1203
    %v1262 = vmul.bf16 %v1254, %v1205
    %v1263 = vmul.bf16 %v1255, %v1207
    %v1264 = vadd.bf16 %v1256, 1048723074
    %v1265 = vadd.bf16 %v1257, 1048723074
    %v1266 = vadd.bf16 %v1258, 1048723074
    %v1267 = vadd.bf16 %v1259, 1048723074
    %v1268 = vadd.bf16 %v1260, 1048723074
    %v1269 = vadd.bf16 %v1261, 1048723074
    %v1270 = vadd.bf16 %v1262, 1048723074
    %v1271 = vadd.bf16 %v1263, 1048723074
    %v1272 = vmul.bf16 %v1264, %v1193
    %v1273 = vmul.bf16 %v1265, %v1195
    %v1274 = vmul.bf16 %v1266, %v1197
    %v1275 = vmul.bf16 %v1267, %v1199
    %v1276 = vmul.bf16 %v1268, %v1201
    %v1277 = vmul.bf16 %v1269, %v1203
    %v1278 = vmul.bf16 %v1270, %v1205
    %v1279 = vmul.bf16 %v1271, %v1207
    %v1280 = vmul.bf16 %v1168, %v1168
    %v1281 = vmul.bf16 %v1169, %v1169
    %v1282 = vmul.bf16 %v1170, %v1170
    %v1283 = vmul.bf16 %v1171, %v1171
    %v1284 = vmul.bf16 %v1172, %v1172
    %v1285 = vmul.bf16 %v1173, %v1173
    %v1286 = vmul.bf16 %v1174, %v1174
    %v1287 = vmul.bf16 %v1175, %v1175
    %v1288 = vsub.bf16 0, %v1280
    %v1289 = vsub.bf16 0, %v1281
    %v1290 = vsub.bf16 0, %v1282
    %v1291 = vsub.bf16 0, %v1283
    %v1292 = vsub.bf16 0, %v1284
    %v1293 = vsub.bf16 0, %v1285
    %v1294 = vsub.bf16 0, %v1286
    %v1295 = vsub.bf16 0, %v1287
    %v1297 = vmul.bf16 %v1288, 1069105081
    %v1298 = vpow.bf16.pop %v1297
    %v1300 = vmul.bf16 %v1289, 1069105081
    %v1301 = vpow.bf16.pop %v1300
    %v1303 = vmul.bf16 %v1290, 1069105081
    %v1304 = vpow.bf16.pop %v1303
    %v1306 = vmul.bf16 %v1291, 1069105081
    %v1307 = vpow.bf16.pop %v1306
    %v1309 = vmul.bf16 %v1292, 1069105081
    %v1310 = vpow.bf16.pop %v1309
    %v1312 = vmul.bf16 %v1293, 1069105081
    %v1313 = vpow.bf16.pop %v1312
    %v1315 = vmul.bf16 %v1294, 1069105081
    %v1316 = vpow.bf16.pop %v1315
    %v1318 = vmul.bf16 %v1295, 1069105081
    %v1319 = vpow.bf16.pop %v1318
    %v1320 = vmul.bf16 %v1272, %v1298
    %v1321 = vmul.bf16 %v1273, %v1301
    %v1322 = vmul.bf16 %v1274, %v1304
    %v1323 = vmul.bf16 %v1275, %v1307
    %v1324 = vmul.bf16 %v1276, %v1310
    %v1325 = vmul.bf16 %v1277, %v1313
    %v1326 = vmul.bf16 %v1278, %v1316
    %v1327 = vmul.bf16 %v1279, %v1319
    %v1328 = vsub.bf16 1065369472, %v1320
    %v1329 = vsub.bf16 1065369472, %v1321
    %v1330 = vsub.bf16 1065369472, %v1322
    %v1331 = vsub.bf16 1065369472, %v1323
    %v1332 = vsub.bf16 1065369472, %v1324
    %v1333 = vsub.bf16 1065369472, %v1325
    %v1334 = vsub.bf16 1065369472, %v1326
    %v1335 = vsub.bf16 1065369472, %v1327
    %vm1336 = vcmp.lt.bf16.partialorder %v1160, 0
    %vm1337 = vcmp.lt.bf16.partialorder %v1161, 0
    %vm1338 = vcmp.lt.bf16.partialorder %v1162, 0
    %vm1339 = vcmp.lt.bf16.partialorder %v1163, 0
    %vm1340 = vcmp.lt.bf16.partialorder %v1164, 0
    %vm1341 = vcmp.lt.bf16.partialorder %v1165, 0
    %vm1342 = vcmp.lt.bf16.partialorder %v1166, 0
    %vm1343 = vcmp.lt.bf16.partialorder %v1167, 0
    %v1344 = vsub.bf16 0, %v1328
    %v1345 = vsub.bf16 0, %v1329
    %v1346 = vsub.bf16 0, %v1330
    %v1347 = vsub.bf16 0, %v1331
    %v1348 = vsub.bf16 0, %v1332
    %v1349 = vsub.bf16 0, %v1333
    %v1350 = vsub.bf16 0, %v1334
    %v1351 = vsub.bf16 0, %v1335
    %v1352 = vsel %vm1336, %v1344, %v1328
    %v1353 = vsel %vm1337, %v1345, %v1329
    %v1354 = vsel %vm1338, %v1346, %v1330
    %v1355 = vsel %vm1339, %v1347, %v1331
    %v1356 = vsel %vm1340, %v1348, %v1332
    %v1357 = vsel %vm1341, %v1349, %v1333
    %v1358 = vsel %vm1342, %v1350, %v1334
    %v1359 = vsel %vm1343, %v1351, %v1335
    %v1360 = vadd.bf16 %v1352, 1065369472
    %v1361 = vadd.bf16 %v1353, 1065369472
    %v1362 = vadd.bf16 %v1354, 1065369472
    %v1363 = vadd.bf16 %v1355, 1065369472
    %v1364 = vadd.bf16 %v1356, 1065369472
    %v1365 = vadd.bf16 %v1357, 1065369472
    %v1366 = vadd.bf16 %v1358, 1065369472
    %v1367 = vadd.bf16 %v1359, 1065369472
    %v1368 = vmul.bf16 %v1152, %v1360
    %v1369 = vmul.bf16 %v1153, %v1361
    %v1370 = vmul.bf16 %v1154, %v1362
    %v1371 = vmul.bf16 %v1155, %v1363
    %v1372 = vmul.bf16 %v1156, %v1364
    %v1373 = vmul.bf16 %v1157, %v1365
    %v1374 = vmul.bf16 %v1158, %v1366
    %v1375 = vmul.bf16 %v1159, %v1367
    %v1376 = vld [vmem:[#allocation3] sm:$0xff]
    %v1377 = vld [vmem:[#allocation3 + $0x8] sm:$0xff]
    %v1506 = vunpack.c.l.b16 %v298
    %v1507 = vunpack.c.l.b16 %v299
    %v1508 = vunpack.c.l.b16 %v300
    %v1509 = vunpack.c.l.b16 %v301
    %v1510 = vunpack.c.l.b16 %v302
    %v1511 = vunpack.c.l.b16 %v303
    %v1512 = vunpack.c.l.b16 %v304
    %v1513 = vunpack.c.l.b16 %v305
    %v1514 = vunpack.c.l.b16 %v306
    %v1515 = vunpack.c.l.b16 %v307
    %v1516 = vunpack.c.l.b16 %v308
    %v1517 = vunpack.c.l.b16 %v309
    %v1518 = vunpack.c.l.b16 %v310
    %v1519 = vunpack.c.l.b16 %v311
    %v1520 = vunpack.c.l.b16 %v312
    %v1521 = vunpack.c.l.b16 %v313
    %v1522 = vunpack.c.l.b16 %v314
    %v1523 = vunpack.c.l.b16 %v315
    %v1524 = vunpack.c.l.b16 %v316
    %v1525 = vunpack.c.l.b16 %v317
    %v1526 = vunpack.c.l.b16 %v318
    %v1527 = vunpack.c.l.b16 %v319
    %v1528 = vunpack.c.l.b16 %v320
    %v1529 = vunpack.c.l.b16 %v321
    %v1530 = vunpack.c.l.b16 %v322
    %v1531 = vunpack.c.l.b16 %v323
    %v1532 = vunpack.c.l.b16 %v324
    %v1533 = vunpack.c.l.b16 %v325
    %v1534 = vunpack.c.l.b16 %v326
    %v1535 = vunpack.c.l.b16 %v327
    %v1536 = vunpack.c.l.b16 %v328
    %v1537 = vunpack.c.l.b16 %v329
    %v1538 = vunpack.c.l.b16 %v330
    %v1539 = vunpack.c.l.b16 %v331
    %v1540 = vunpack.c.l.b16 %v332
    %v1541 = vunpack.c.l.b16 %v333
    %v1542 = vunpack.c.l.b16 %v334
    %v1543 = vunpack.c.l.b16 %v335
    %v1544 = vunpack.c.l.b16 %v336
    %v1545 = vunpack.c.l.b16 %v337
    %v1546 = vunpack.c.l.b16 %v338
    %v1547 = vunpack.c.l.b16 %v339
    %v1548 = vunpack.c.l.b16 %v340
    %v1549 = vunpack.c.l.b16 %v341
    %v1550 = vunpack.c.l.b16 %v342
    %v1551 = vunpack.c.l.b16 %v343
    %v1552 = vunpack.c.l.b16 %v344
    %v1553 = vunpack.c.l.b16 %v345
    %v1554 = vunpack.c.l.b16 %v346
    %v1555 = vunpack.c.l.b16 %v347
    %v1556 = vunpack.c.l.b16 %v348
    %v1557 = vunpack.c.l.b16 %v349
    %v1558 = vunpack.c.l.b16 %v350
    %v1559 = vunpack.c.l.b16 %v351
    %v1560 = vunpack.c.l.b16 %v352
    %v1561 = vunpack.c.l.b16 %v353
    %v1562 = vunpack.c.l.b16 %v354
    %v1563 = vunpack.c.l.b16 %v355
    %v1564 = vunpack.c.l.b16 %v356
    %v1565 = vunpack.c.l.b16 %v357
    %v1566 = vunpack.c.l.b16 %v358
    %v1567 = vunpack.c.l.b16 %v359
    %v1568 = vunpack.c.l.b16 %v360
    %v1569 = vunpack.c.l.b16 %v361
    %v1570 = vunpack.c.l.b16 %v362
    %v1571 = vunpack.c.l.b16 %v363
    %v1572 = vunpack.c.l.b16 %v364
    %v1573 = vunpack.c.l.b16 %v365
    %v1574 = vunpack.c.l.b16 %v366
    %v1575 = vunpack.c.l.b16 %v367
    %v1576 = vunpack.c.l.b16 %v368
    %v1577 = vunpack.c.l.b16 %v369
    %v1578 = vunpack.c.l.b16 %v370
    %v1579 = vunpack.c.l.b16 %v371
    %v1580 = vunpack.c.l.b16 %v372
    %v1581 = vunpack.c.l.b16 %v373
    %v1582 = vunpack.c.l.b16 %v374
    %v1583 = vunpack.c.l.b16 %v375
    %v1584 = vunpack.c.l.b16 %v376
    %v1585 = vunpack.c.l.b16 %v377
    %v1586 = vunpack.c.l.b16 %v378
    %v1587 = vunpack.c.l.b16 %v379
    %v1588 = vunpack.c.l.b16 %v380
    %v1589 = vunpack.c.l.b16 %v381
    %v1590 = vunpack.c.l.b16 %v382
    %v1591 = vunpack.c.l.b16 %v383
    %v1592 = vunpack.c.l.b16 %v384
    %v1593 = vunpack.c.l.b16 %v385
    %v1594 = vunpack.c.l.b16 %v386
    %v1595 = vunpack.c.l.b16 %v387
    %v1596 = vunpack.c.l.b16 %v388
    %v1597 = vunpack.c.l.b16 %v389
    %v1598 = vunpack.c.l.b16 %v390
    %v1599 = vunpack.c.l.b16 %v391
    %v1600 = vunpack.c.l.b16 %v392
    %v1601 = vunpack.c.l.b16 %v393
    %v1602 = vunpack.c.l.b16 %v394
    %v1603 = vunpack.c.l.b16 %v395
    %v1604 = vunpack.c.l.b16 %v396
    %v1605 = vunpack.c.l.b16 %v397
    %v1606 = vunpack.c.l.b16 %v398
    %v1607 = vunpack.c.l.b16 %v399
    %v1608 = vunpack.c.l.b16 %v400
    %v1609 = vunpack.c.l.b16 %v401
    %v1610 = vunpack.c.l.b16 %v402
    %v1611 = vunpack.c.l.b16 %v403
    %v1612 = vunpack.c.l.b16 %v404
    %v1613 = vunpack.c.l.b16 %v405
    %v1614 = vunpack.c.l.b16 %v406
    %v1615 = vunpack.c.l.b16 %v407
    %v1616 = vunpack.c.l.b16 %v408
    %v1617 = vunpack.c.l.b16 %v409
    %v1618 = vunpack.c.l.b16 %v410
    %v1619 = vunpack.c.l.b16 %v411
    %v1620 = vunpack.c.l.b16 %v412
    %v1621 = vunpack.c.l.b16 %v413
    %v1622 = vunpack.c.l.b16 %v414
    %v1623 = vunpack.c.l.b16 %v415
    %v1624 = vunpack.c.l.b16 %v416
    %v1625 = vunpack.c.l.b16 %v417
    %v1626 = vunpack.c.l.b16 %v418
    %v1627 = vunpack.c.l.b16 %v419
    %v1628 = vunpack.c.l.b16 %v420
    %v1629 = vunpack.c.l.b16 %v421
    %v1630 = vunpack.c.l.b16 %v422
    %v1631 = vunpack.c.l.b16 %v423
    %v1632 = vunpack.c.l.b16 %v424
    %v1633 = vunpack.c.l.b16 %v425
    %v1634 = vpack.c.b16 %v1507, %v1506
    %v1635 = vpack.c.b16 %v1509, %v1508
    %v1636 = vpack.c.b16 %v1511, %v1510
    %v1637 = vpack.c.b16 %v1513, %v1512
    %v1638 = vpack.c.b16 %v1515, %v1514
    %v1639 = vpack.c.b16 %v1517, %v1516
    %v1640 = vpack.c.b16 %v1519, %v1518
    %v1641 = vpack.c.b16 %v1521, %v1520
    %v1642 = vpack.c.b16 %v1523, %v1522
    %v1643 = vpack.c.b16 %v1525, %v1524
    %v1644 = vpack.c.b16 %v1527, %v1526
    %v1645 = vpack.c.b16 %v1529, %v1528
    %v1646 = vpack.c.b16 %v1531, %v1530
    %v1647 = vpack.c.b16 %v1533, %v1532
    %v1648 = vpack.c.b16 %v1535, %v1534
    %v1649 = vpack.c.b16 %v1537, %v1536
    %v1650 = vpack.c.b16 %v1539, %v1538
    %v1651 = vpack.c.b16 %v1541, %v1540
    %v1652 = vpack.c.b16 %v1543, %v1542
    %v1653 = vpack.c.b16 %v1545, %v1544
    %v1654 = vpack.c.b16 %v1547, %v1546
    %v1655 = vpack.c.b16 %v1549, %v1548
    %v1656 = vpack.c.b16 %v1551, %v1550
    %v1657 = vpack.c.b16 %v1553, %v1552
    %v1658 = vpack.c.b16 %v1555, %v1554
    %v1659 = vpack.c.b16 %v1557, %v1556
    %v1660 = vpack.c.b16 %v1559, %v1558
    %v1661 = vpack.c.b16 %v1561, %v1560
    %v1662 = vpack.c.b16 %v1563, %v1562
    %v1663 = vpack.c.b16 %v1565, %v1564
    %v1664 = vpack.c.b16 %v1567, %v1566
    %v1665 = vpack.c.b16 %v1569, %v1568
    %v1666 = vpack.c.b16 %v1571, %v1570
    %v1667 = vpack.c.b16 %v1573, %v1572
    %v1668 = vpack.c.b16 %v1575, %v1574
    %v1669 = vpack.c.b16 %v1577, %v1576
    %v1670 = vpack.c.b16 %v1579, %v1578
    %v1671 = vpack.c.b16 %v1581, %v1580
    %v1672 = vpack.c.b16 %v1583, %v1582
    %v1673 = vpack.c.b16 %v1585, %v1584
    %v1674 = vpack.c.b16 %v1587, %v1586
    %v1675 = vpack.c.b16 %v1589, %v1588
    %v1676 = vpack.c.b16 %v1591, %v1590
    %v1677 = vpack.c.b16 %v1593, %v1592
    %v1678 = vpack.c.b16 %v1595, %v1594
    %v1679 = vpack.c.b16 %v1597, %v1596
    %v1680 = vpack.c.b16 %v1599, %v1598
    %v1681 = vpack.c.b16 %v1601, %v1600
    %v1682 = vpack.c.b16 %v1603, %v1602
    %v1683 = vpack.c.b16 %v1605, %v1604
    %v1684 = vpack.c.b16 %v1607, %v1606
    %v1685 = vpack.c.b16 %v1609, %v1608
    %v1686 = vpack.c.b16 %v1611, %v1610
    %v1687 = vpack.c.b16 %v1613, %v1612
    %v1688 = vpack.c.b16 %v1615, %v1614
    %v1689 = vpack.c.b16 %v1617, %v1616
    %v1690 = vpack.c.b16 %v1619, %v1618
    %v1691 = vpack.c.b16 %v1621, %v1620
    %v1692 = vpack.c.b16 %v1623, %v1622
    %v1693 = vpack.c.b16 %v1625, %v1624
    %v1694 = vpack.c.b16 %v1627, %v1626
    %v1695 = vpack.c.b16 %v1629, %v1628
    %v1696 = vpack.c.b16 %v1631, %v1630
    %v1697 = vpack.c.b16 %v1633, %v1632
    %1762 = vmatprep.subr.bf16.mxu0 0
    %1763 = vmatpush1.bf16.msra.mxu0 %v1641
    %1764 = vmatprep.subr.bf16.mxu0 0
    %1765 = vmatpush1.bf16.msra.mxu0 %v1640
    %1766 = vmatprep.subr.bf16.mxu0 0
    %1767 = vmatpush1.bf16.msra.mxu0 %v1639
    %1768 = vmatprep.subr.bf16.mxu0 0
    %1769 = vmatpush1.bf16.msra.mxu0 %v1638
    %1770 = vmatprep.subr.bf16.mxu0 0
    %1771 = vmatpush1.bf16.msra.mxu0 %v1637
    %1772 = vmatprep.subr.bf16.mxu0 0
    %1773 = vmatpush1.bf16.msra.mxu0 %v1636
    %1774 = vmatprep.subr.bf16.mxu0 0
    %1775 = vmatpush1.bf16.msra.mxu0 %v1635
    %1776 = vmatprep.subr.bf16.mxu0 0
    %1777 = vmatpush1.bf16.msra.mxu0 %v1634
    %1778 = vmatprep.subr.bf16.mxu0 0
    %1779 = vmatpush2.bf16.msra.mxu0 %v1649
    %1780 = vmatprep.subr.bf16.mxu0 0
    %1781 = vmatpush2.bf16.msra.mxu0 %v1648
    %1782 = vmatprep.subr.bf16.mxu0 0
    %1783 = vmatpush2.bf16.msra.mxu0 %v1647
    %1784 = vmatprep.subr.bf16.mxu0 0
    %1785 = vmatpush2.bf16.msra.mxu0 %v1646
    %1786 = vmatprep.subr.bf16.mxu0 0
    %1787 = vmatpush2.bf16.msra.mxu0 %v1645
    %1788 = vmatprep.subr.bf16.mxu0 0
    %1789 = vmatpush2.bf16.msra.mxu0 %v1644
    %1790 = vmatprep.subr.bf16.mxu0 0
    %1791 = vmatpush2.bf16.msra.mxu0 %v1643
    %1792 = vmatprep.subr.bf16.mxu0 0
    %1793 = vmatpush2.bf16.msra.mxu0 %v1642
    %1794 = vmatprep.mubr.bf16.mxu0 %v1369
    %1795 = vmatmul.mubr.bf16.gmra.mxu0 %v1368
    %v1796 = vpop.f32.mrf.mxu0
    %v1797 = vadd.f32 0.0, %v1796
    %v1798 = vpop.f32.mrf.mxu0
    %v1799 = vpop.f32.mrf.mxu0
    %v1800 = vadd.f32 0.0, %v1799
    %v1801 = vpop.f32.mrf.mxu0
    %1802 = vdwg.mxu0
    %1803 = vmatprep.subr.bf16.mxu0 0
    %1804 = vmatpush1.bf16.msra.mxu0 %v1657
    %1805 = vmatprep.subr.bf16.mxu0 0
    %1806 = vmatpush1.bf16.msra.mxu0 %v1656
    %1807 = vmatprep.subr.bf16.mxu0 0
    %1808 = vmatpush1.bf16.msra.mxu0 %v1655
    %1809 = vmatprep.subr.bf16.mxu0 0
    %1810 = vmatpush1.bf16.msra.mxu0 %v1654
    %1811 = vmatprep.subr.bf16.mxu0 0
    %1812 = vmatpush1.bf16.msra.mxu0 %v1653
    %1813 = vmatprep.subr.bf16.mxu0 0
    %1814 = vmatpush1.bf16.msra.mxu0 %v1652
    %1815 = vmatprep.subr.bf16.mxu0 0
    %1816 = vmatpush1.bf16.msra.mxu0 %v1651
    %1817 = vmatprep.subr.bf16.mxu0 0
    %1818 = vmatpush1.bf16.msra.mxu0 %v1650
    %1819 = vmatprep.subr.bf16.mxu0 0
    %1820 = vmatpush2.bf16.msra.mxu0 %v1665
    %1821 = vmatprep.subr.bf16.mxu0 0
    %1822 = vmatpush2.bf16.msra.mxu0 %v1664
    %1823 = vmatprep.subr.bf16.mxu0 0
    %1824 = vmatpush2.bf16.msra.mxu0 %v1663
    %1825 = vmatprep.subr.bf16.mxu0 0
    %1826 = vmatpush2.bf16.msra.mxu0 %v1662
    %1827 = vmatprep.subr.bf16.mxu0 0
    %1828 = vmatpush2.bf16.msra.mxu0 %v1661
    %1829 = vmatprep.subr.bf16.mxu0 0
    %1830 = vmatpush2.bf16.msra.mxu0 %v1660
    %1831 = vmatprep.subr.bf16.mxu0 0
    %1832 = vmatpush2.bf16.msra.mxu0 %v1659
    %1833 = vmatprep.subr.bf16.mxu0 0
    %1834 = vmatpush2.bf16.msra.mxu0 %v1658
    %1835 = vmatprep.mubr.bf16.mxu0 %v1371
    %1836 = vmatmul.mubr.bf16.gmra.mxu0 %v1370
    %v1837 = vpop.f32.mrf.mxu0
    %v1838 = vadd.f32 %v1797, %v1837
    %v1839 = vpop.f32.mrf.mxu0
    %v1840 = vpop.f32.mrf.mxu0
    %v1841 = vadd.f32 %v1800, %v1840
    %v1842 = vpop.f32.mrf.mxu0
    %1843 = vdwg.mxu0
    %1844 = vmatprep.subr.bf16.mxu0 0
    %1845 = vmatpush1.bf16.msra.mxu0 %v1673
    %1846 = vmatprep.subr.bf16.mxu0 0
    %1847 = vmatpush1.bf16.msra.mxu0 %v1672
    %1848 = vmatprep.subr.bf16.mxu0 0
    %1849 = vmatpush1.bf16.msra.mxu0 %v1671
    %1850 = vmatprep.subr.bf16.mxu0 0
    %1851 = vmatpush1.bf16.msra.mxu0 %v1670
    %1852 = vmatprep.subr.bf16.mxu0 0
    %1853 = vmatpush1.bf16.msra.mxu0 %v1669
    %1854 = vmatprep.subr.bf16.mxu0 0
    %1855 = vmatpush1.bf16.msra.mxu0 %v1668
    %1856 = vmatprep.subr.bf16.mxu0 0
    %1857 = vmatpush1.bf16.msra.mxu0 %v1667
    %1858 = vmatprep.subr.bf16.mxu0 0
    %1859 = vmatpush1.bf16.msra.mxu0 %v1666
    %1860 = vmatprep.subr.bf16.mxu0 0
    %1861 = vmatpush2.bf16.msra.mxu0 %v1681
    %1862 = vmatprep.subr.bf16.mxu0 0
    %1863 = vmatpush2.bf16.msra.mxu0 %v1680
    %1864 = vmatprep.subr.bf16.mxu0 0
    %1865 = vmatpush2.bf16.msra.mxu0 %v1679
    %1866 = vmatprep.subr.bf16.mxu0 0
    %1867 = vmatpush2.bf16.msra.mxu0 %v1678
    %1868 = vmatprep.subr.bf16.mxu0 0
    %1869 = vmatpush2.bf16.msra.mxu0 %v1677
    %1870 = vmatprep.subr.bf16.mxu0 0
    %1871 = vmatpush2.bf16.msra.mxu0 %v1676
    %1872 = vmatprep.subr.bf16.mxu0 0
    %1873 = vmatpush2.bf16.msra.mxu0 %v1675
    %1874 = vmatprep.subr.bf16.mxu0 0
    %1875 = vmatpush2.bf16.msra.mxu0 %v1674
    %1876 = vmatprep.mubr.bf16.mxu0 %v1373
    %1877 = vmatmul.mubr.bf16.gmra.mxu0 %v1372
    %v1878 = vpop.f32.mrf.mxu0
    %v1879 = vadd.f32 %v1838, %v1878
    %v1880 = vpop.f32.mrf.mxu0
    %v1881 = vpop.f32.mrf.mxu0
    %v1882 = vadd.f32 %v1841, %v1881
    %v1883 = vpop.f32.mrf.mxu0
    %1884 = vdwg.mxu0
    %1885 = vmatprep.subr.bf16.mxu0 0
    %1886 = vmatpush1.bf16.msra.mxu0 %v1689
    %1887 = vmatprep.subr.bf16.mxu0 0
    %1888 = vmatpush1.bf16.msra.mxu0 %v1688
    %1889 = vmatprep.subr.bf16.mxu0 0
    %1890 = vmatpush1.bf16.msra.mxu0 %v1687
    %1891 = vmatprep.subr.bf16.mxu0 0
    %1892 = vmatpush1.bf16.msra.mxu0 %v1686
    %1893 = vmatprep.subr.bf16.mxu0 0
    %1894 = vmatpush1.bf16.msra.mxu0 %v1685
    %1895 = vmatprep.subr.bf16.mxu0 0
    %1896 = vmatpush1.bf16.msra.mxu0 %v1684
    %1897 = vmatprep.subr.bf16.mxu0 0
    %1898 = vmatpush1.bf16.msra.mxu0 %v1683
    %1899 = vmatprep.subr.bf16.mxu0 0
    %1900 = vmatpush1.bf16.msra.mxu0 %v1682
    %1901 = vmatprep.subr.bf16.mxu0 0
    %1902 = vmatpush2.bf16.msra.mxu0 %v1697
    %1903 = vmatprep.subr.bf16.mxu0 0
    %1904 = vmatpush2.bf16.msra.mxu0 %v1696
    %1905 = vmatprep.subr.bf16.mxu0 0
    %1906 = vmatpush2.bf16.msra.mxu0 %v1695
    %1907 = vmatprep.subr.bf16.mxu0 0
    %1908 = vmatpush2.bf16.msra.mxu0 %v1694
    %1909 = vmatprep.subr.bf16.mxu0 0
    %1910 = vmatpush2.bf16.msra.mxu0 %v1693
    %1911 = vmatprep.subr.bf16.mxu0 0
    %1912 = vmatpush2.bf16.msra.mxu0 %v1692
    %1913 = vmatprep.subr.bf16.mxu0 0
    %1914 = vmatpush2.bf16.msra.mxu0 %v1691
    %1915 = vmatprep.subr.bf16.mxu0 0
    %1916 = vmatpush2.bf16.msra.mxu0 %v1690
    %1917 = vmatprep.mubr.bf16.mxu0 %v1375
    %1918 = vmatmul.mubr.bf16.gmra.mxu0 %v1374
    %v1919 = vpop.f32.mrf.mxu0
    %v1920 = vadd.f32 %v1879, %v1919
    %v1921 = vpop.f32.mrf.mxu0
    %v1922 = vpop.f32.mrf.mxu0
    %v1923 = vadd.f32 %v1882, %v1922
    %v1924 = vpop.f32.mrf.mxu0
    %1925 = vdwg.mxu0
    %v1926 = vadd.f32 %v1376, %v1920
    %v1927 = vadd.f32 %v1377, %v1923
    %1928 = vst [vmem:[#allocation3] sm:$0xff] %v1926
    %1929 = vst [vmem:[#allocation3 + $0x8] sm:$0xff] %v1927
    // Predicated region
    $region50: #{tpu_custom_call.1} parent=1 // pred_check
      %p1930 = pneg %p90
    $region51: #{tpu_custom_call.1} parent=1 // pred_check_branch
      %1932 = sbr.rel (%p1930) target = $region53
    $region52: #{tpu_custom_call.1} parent=1 // pred_region
      %v1933 = vld [vmem:[#allocation3] sm:$0xff]
      %v1934 = vld [vmem:[#allocation3 + $0x8] sm:$0xff]
      %v1935 = vld [vmem:[%s6] sm:$0x1]
      %v1937 = vlaneseq
      %v1938 = vshrl.u32 %v1937, 7
      %v1939 = vsub.s32 0, %v1938
      %v1940 = vrot.slane %v1935, %v1939
      %v1942 = vadd.f32 %v1933, %v1940
      %v1943 = vadd.f32 %v1934, %v1940
      %vm1944 = vcmp.ne.f32.partialorder %v1942, %v1942
      %vm1945 = vcmp.ne.f32.partialorder %v1943, %v1943
      %v1946 = vsel %vm1944, 0.0, %v1942
      %v1947 = vsel %vm1945, 0.0, %v1943
      %v1948 = vand.u32 2147483647, %v1946
      %v1949 = vand.u32 2147483647, %v1947
      %vm1950 = vcmp.eq.f32.partialorder %v1948, inf
      %vm1951 = vcmp.eq.f32.partialorder %v1949, inf
      %vm1952 = vcmp.gt.f32.partialorder %v1946, 0.0
      %vm1953 = vcmp.gt.f32.partialorder %v1947, 0.0
      %v1954 = vsel %vm1952, 5.0, -5.0
      %v1955 = vsel %vm1953, 5.0, -5.0
      %v1956 = vsel %vm1950, %v1954, %v1946
      %v1957 = vsel %vm1951, %v1955, %v1947
      %v1958 = vld [vmem:[#allocation4] sm:$0xff]
      %v1959 = vld [vmem:[#allocation4 + $0x8] sm:$0xff]
      %v1960 = vadd.f32 %v1958, %v1956
      %v1961 = vadd.f32 %v1959, %v1957
      %vm1962 = vcmp.ne.f32.partialorder %v1960, %v1960
      %vm1963 = vcmp.ne.f32.partialorder %v1961, %v1961
      %v1964 = vsel %vm1962, 0.0, %v1960
      %v1965 = vsel %vm1963, 0.0, %v1961
      %v1966 = vand.u32 2147483647, %v1964
      %v1967 = vand.u32 2147483647, %v1965
      %vm1968 = vcmp.eq.f32.partialorder %v1966, inf
      %vm1969 = vcmp.eq.f32.partialorder %v1967, inf
      %vm1970 = vcmp.gt.f32.partialorder %v1964, 0.0
      %vm1971 = vcmp.gt.f32.partialorder %v1965, 0.0
      %v1972 = vsel %vm1970, 5.0, -5.0
      %v1973 = vsel %vm1971, 5.0, -5.0
      %v1974 = vsel %vm1968, %v1972, %v1964
      %v1975 = vsel %vm1969, %v1973, %v1965
      %1976 = vst [vmem:[#allocation12] sm:$0xff] %v1974
      %1977 = vst [vmem:[#allocation12 + $0x8] sm:$0xff] %v1975
    $region53: #{tpu_custom_call.1} parent=1 // pred_fallthru
      _
    // Predicated region
    $region54: #{tpu_custom_call.1} parent=1 // pred_check
      _
    $region55: #{tpu_custom_call.1} parent=1 // pred_check_branch
      %1979 = sbr.rel (0) target = $region57
    $region56: #{tpu_custom_call.1} parent=1 // pred_region
      %s1981 = ssub.s32 256, 256
      %1982 = vsyncadd [#allocation6], %s1981
      %s1983 = sshll.u32 [#allocation12], 4
      %s1984 = int_to_ptr.vmem [resolvable:$true] %s1983
      %1989 = dma.vmem_to_hbm [thread:$0]  %s1984, 256, %s7, [#allocation6], 128, 128, 8
    $region57: #{tpu_custom_call.1} parent=1 // pred_fallthru
      _
    // Predicated region
    $region58: #{tpu_custom_call.1} parent=1 // pred_check
      _
    $region59: #{tpu_custom_call.1} parent=1 // pred_check_branch
      %1991 = sbr.rel (0) target = $region61
    $region60: #{tpu_custom_call.1} parent=1 // pred_region
      %1992 = dma.done [#allocation6], 256
    $region61: #{tpu_custom_call.1} parent=1 // pred_fallthru
      _
    %1993 = vsyncpa [#allocation5], 1
    %1994 = vsyncpa [#allocation8], 1
    %1995 = vsyncpa [#allocation11], 1
    %1996 = vsyncpa [#allocation6], 1

</llo_original>
